<compile_context>
chip_gen: v7x
topology: tpu7x:2x2x1
jax: 0.10.0
libtpu: 0.0.40
codegen_flags: <defaults>
</compile_context>

<pallas_src>
import functools

import jax
import jax.numpy as jnp
import numpy as np
from jax import lax
from jax.experimental import pallas as pl
from jax.experimental.pallas import tpu as pltpu

_BIG = 1e30  # Python float literal only (never a module-level jax.Array const)


def _triplet_kernel(mi_smem, det_ref, trk_ref, mivec_ref, out_ref,
                    allmin_ref, t2min_ref, t3min_ref, t1_ref,
                    *, margin, n_valid, n_tracks, tile_n):
    """Grid axis 0 streams detection tiles.

    mi_smem:   (M,)  int32 SMEM  matched det index per track, -1 for zero column
    det_ref:   (TILE_N, D) VMEM  detection features (padded rows masked)
    trk_ref:   (M, D)      VMEM  track features (resident across the grid)
    mivec_ref: (1, M) int32 VMEM lane-dense copy of mi
    out_ref:   (1, 1) f32  VMEM  scalar loss (written on the last tile)
    scratch:   four (1, M) f32 rows: all-min, excluded-min, t3-min, t1
    """
    tile = pl.program_id(0)
    n0 = tile * tile_n
    m_cnt = n_tracks

    @pl.when(tile == 0)
    def _init():
        big = jnp.full((1, m_cnt), _BIG, jnp.float32)
        allmin_ref[...] = big
        t2min_ref[...] = big
        t3min_ref[...] = big
        t1_ref[...] = jnp.zeros((1, m_cnt), jnp.float32)

    det = det_ref[...]                                           # (TILE_N, D)
    mi_row = mivec_ref[...]                                      # (1, M) int32

    n_local = lax.broadcasted_iota(jnp.int32, (tile_n, 1), 0)    # (TILE_N, 1)
    n_global = n_local + n0
    valid_n = n_global < n_valid                                 # mask padded rows
    lane_m = lax.broadcasted_iota(jnp.int32, (1, m_cnt), 1)      # (1, M)

    # Selector of each track's matched detection inside this tile (hoisted).
    sel3 = n_global == mi_row                                    # (TILE_N, M)
    in_tile = (mi_row >= n0) & (mi_row < n0 + tile_n)            # (1, M)

    def body(m, carry):
        trk_row = trk_ref[pl.ds(m, 1), :]                        # (1, D)
        # L1 distance of track m to every detection in this tile.
        dcol = jnp.sum(jnp.abs(det - trk_row), axis=1, keepdims=True)  # (TILE_N,1)
        sel_m = lane_m == m                                      # (1, M)
        mi_m = mi_smem[m]                                        # scalar (-1 => zero col)

        # Running min over ALL valid detections (zero-column branch value).
        tmin_all = jnp.min(jnp.where(valid_n, dcol, _BIG), axis=0, keepdims=True)
        allmin_ref[...] = jnp.where(
            sel_m, jnp.minimum(allmin_ref[...], tmin_all), allmin_ref[...])

        # triplet_2: running min excluding track m's own matched detection.
        keep = valid_n & (n_global != mi_m)
        tmin_ex = jnp.min(jnp.where(keep, dcol, _BIG), axis=0, keepdims=True)
        t2min_ref[...] = jnp.where(
            sel_m, jnp.minimum(t2min_ref[...], tmin_ex), t2min_ref[...])

        # triplet_3: for every OTHER track q whose matched detection lies in
        # this tile, d(track m, matched_det(q)) is a candidate.  VPU gather of
        # dcol at q's matched row + running min (no MXU one-hot gather).
        gathered = jnp.sum(jnp.where(sel3, dcol, 0.0), axis=0, keepdims=True)  # (1,M)
        cand = jnp.where(in_tile & (lane_m != m), gathered, _BIG)
        t3min_ref[...] = jnp.minimum(t3min_ref[...], cand)

        # triplet_1 (reference quirk: L1 distance to the *index* scalar).
        t1_val = jnp.sum(jnp.abs(trk_row - mi_m.astype(jnp.float32)),
                         axis=1, keepdims=True)                  # (1, 1)
        t1_ref[...] = jnp.where(sel_m, t1_val, t1_ref[...])
        return carry

    lax.fori_loop(0, m_cnt, body, 0, unroll=(m_cnt <= 32))

    @pl.when(tile == pl.num_programs(0) - 1)
    def _finalize():
        zero_mask = mi_row < 0                                   # (1, M)
        zero_val = allmin_ref[...] + margin
        t1 = t1_ref[...]
        t2 = t2min_ref[...] if n_valid > 1 else jnp.zeros((1, m_cnt), jnp.float32)
        t3 = t3min_ref[...] if m_cnt > 1 else jnp.zeros((1, m_cnt), jnp.float32)
        hinge = jnp.maximum(t1 - t2 - t3 + margin, 0.0)
        # Reference order semantics: the LAST zero column replaces the loss,
        # later matched columns add their hinge on top.
        last_zero = jnp.max(jnp.where(zero_mask, lane_m, -1), axis=1, keepdims=True)
        base = jnp.where(lane_m == last_zero, zero_val, 0.0)
        contrib = jnp.where((lane_m > last_zero) & jnp.logical_not(zero_mask),
                            hinge, 0.0)
        out_ref[...] = jnp.sum(base + contrib, axis=1, keepdims=True)


def _round_up(x, k):
    return (x + k - 1) // k * k


def triplet_loss_pallas(embeddings, gt_aff_mat, margin, *, tile_n=256):
    N, M = gt_aff_mat.shape
    D = embeddings.shape[1]
    assert embeddings.shape == (N + M, 256)

    det = embeddings[:N]                       # (N, D)  detection features
    trk = embeddings[N:]                       # (M, D)  track features

    # Matched detection index per track (first nonzero row); -1 for columns whose
    # SUM is exactly zero (the reference's branch condition).  Tiny O(N*M) prep,
    # left to XLA outside the kernel.
    colsum = jnp.sum(gt_aff_mat, axis=0)
    first_nz = jnp.argmax(gt_aff_mat != 0, axis=0).astype(jnp.int32)
    mi = jnp.where(colsum == 0, jnp.int32(-1), first_nz)         # (M,) int32
    mi_vec = mi.reshape(1, M)

    # Detection tiling: tile_n multiple of 8, no over-padding for small N.
    tile_n = int(tile_n)
    assert tile_n % 8 == 0 and tile_n > 0
    tile_n = min(tile_n, _round_up(N, 8))
    n_pad = _round_up(N, tile_n)
    det_p = jnp.pad(det, ((0, n_pad - N), (0, 0)))
    num_tiles = n_pad // tile_n

    kernel = functools.partial(
        _triplet_kernel, margin=float(margin), n_valid=int(N),
        n_tracks=int(M), tile_n=int(tile_n))

    out = pl.pallas_call(
        kernel,
        out_shape=jax.ShapeDtypeStruct((1, 1), jnp.float32),
        grid_spec=pltpu.PrefetchScalarGridSpec(
            num_scalar_prefetch=1,
            grid=(num_tiles,),
            in_specs=[
                pl.BlockSpec((tile_n, D), lambda i, mi_ref: (i, 0)),  # det stream
                pl.BlockSpec((M, D), lambda i, mi_ref: (0, 0)),       # trk, resident
                pl.BlockSpec((1, M), lambda i, mi_ref: (0, 0)),       # matched idx row
            ],
            out_specs=pl.BlockSpec((1, 1), lambda i, mi_ref: (0, 0)),
            scratch_shapes=[pltpu.VMEM((1, M), jnp.float32)] * 4,
        ),
        compiler_params=pltpu.CompilerParams(
            dimension_semantics=("arbitrary",)),   # reduction over det tiles
    )(mi, det_p, trk, mi_vec)
    return out.reshape(1)


def triplet_loss_ref(embeddings, gt_aff_mat, margin):
    """Plain numpy mirror of the PyTorch forward (including its quirks)."""
    emb = np.asarray(embeddings, dtype=np.float64)
    gt = np.asarray(gt_aff_mat, dtype=np.float64)
    N, M = gt.shape
    loss = 0.0
    for idx in range(M):
        t = emb[N + idx]
        if gt[:, idx].sum() == 0:
            t2 = np.min(np.abs(t - emb[:N]).sum(axis=1))
            loss = t2 + margin                      # replaced, per reference
        else:
            mi = int(np.nonzero(gt[:, idx])[0][0])
            md = emb[mi]
            ud = np.concatenate([emb[:mi], emb[mi + 1:N]], axis=0)
            ut = np.concatenate([emb[N:N + idx], emb[N + idx + 1:N + M]], axis=0)
            t1 = np.abs(t - mi).sum()               # reference quirk
            t2 = np.min(np.abs(t - ud).sum(axis=1)) if ud.shape[0] else 0.0
            t3 = np.min(np.abs(md - ut).sum(axis=1)) if ut.shape[0] else 0.0
            loss = loss + max(t1 - t2 - t3 + margin, 0.0)
    return np.array([loss], dtype=np.float32)


if __name__ == "__main__":
    N, M, D = 21, 5, 256
    margin = 0.3

    key = jax.random.PRNGKey(0)
    embeddings = jax.random.normal(key, (N + M, D), dtype=jnp.float32)

    # gt_aff_mat: each column is either all-zero or has exactly one match.
    gt = np.zeros((N, M), dtype=np.float32)
    gt[2, 0] = 1.0      # match in detection tile 0
    # column 1 left all-zero (exercises the "replace the loss" branch)
    gt[18, 2] = 1.0     # match in detection tile 1
    gt[0, 3] = 1.0      # match at the very first detection
    gt[20, 4] = 1.0     # match at the last valid detection (next to padding)
    gt_aff_mat = jnp.asarray(gt)

    ref = triplet_loss_ref(np.asarray(embeddings), gt, margin)

    # Multi-tile path: grid of 2 detection tiles with padded N.
    out_multi = jax.block_until_ready(
        triplet_loss_pallas(embeddings, gt_aff_mat, margin, tile_n=16))
    np.testing.assert_allclose(np.asarray(out_multi), ref, rtol=2e-4, atol=1e-2)

    # Single-tile path: whole detection set in one block.
    out_single = jax.block_until_ready(
        triplet_loss_pallas(embeddings, gt_aff_mat, margin, tile_n=256))
    np.testing.assert_allclose(np.asarray(out_single), ref, rtol=2e-4, atol=1e-2)

    print("KERNEL_OK")
</pallas_src>

<mosaic_0001>
module attributes {stable_mosaic.version = 11 : i64} {
  func.func @_triplet_kernel(%arg0: i32, %arg1: memref<5xi32, #tpu.memory_space<smem>>, %arg2: memref<16x256xf32, #tpu.memory_space<vmem>>, %arg3: memref<5x256xf32, #tpu.memory_space<vmem>>, %arg4: memref<1x5xi32, #tpu.memory_space<vmem>>, %arg5: memref<1x1xf32, #tpu.memory_space<vmem>>, %arg6: memref<1x5xf32, #tpu.memory_space<vmem>>, %arg7: memref<1x5xf32, #tpu.memory_space<vmem>>, %arg8: memref<1x5xf32, #tpu.memory_space<vmem>>, %arg9: memref<1x5xf32, #tpu.memory_space<vmem>>) attributes {dimension_semantics = [#tpu.dimension_semantics<arbitrary>], iteration_bounds = array<i64: 2>, scalar_prefetch = 1 : i64, scratch_operands = 4 : i64, tpu.core_type = #tpu.core_type<tc>, window_params = [{transform_indices = @transform_0, window_bounds = array<i64: 16, 256>}, {pipeline_mode = #tpu.pipeline_mode<synchronous>, transform_indices = @transform_1, window_bounds = array<i64: 5, 256>}, {pipeline_mode = #tpu.pipeline_mode<synchronous>, transform_indices = @transform_2, window_bounds = array<i64: 1, 5>}, {pipeline_mode = #tpu.pipeline_mode<synchronous>, transform_indices = @transform_3, window_bounds = array<i64: 1, 1>}]} {
    %c16_i32 = arith.constant 16 : i32
    %0 = arith.muli %arg0, %c16_i32 : i32
    %c0_i32 = arith.constant 0 : i32
    %1 = arith.cmpi eq, %arg0, %c0_i32 : i32
    %2 = arith.extui %1 : i1 to i32
    %c0_i32_0 = arith.constant 0 : i32
    %3 = arith.cmpi ne, %2, %c0_i32_0 : i32
    scf.if %3 {
      %cst_157 = arith.constant 1.000000e+30 : f32
      %319 = vector.broadcast %cst_157 : f32 to vector<1x5xf32>
      %c0_158 = arith.constant 0 : index
      %c0_159 = arith.constant 0 : index
      %320 = vector.load %arg6[%c0_158, %c0_159] : memref<1x5xf32, #tpu.memory_space<vmem>>, vector<1x5xf32>
      tpu.vector_store %arg6[%c0_158, %c0_159], %319 {strides = array<i32>} : memref<1x5xf32, #tpu.memory_space<vmem>>, vector<1x5xf32>,
      %c0_160 = arith.constant 0 : index
      %c0_161 = arith.constant 0 : index
      %321 = vector.load %arg7[%c0_160, %c0_161] : memref<1x5xf32, #tpu.memory_space<vmem>>, vector<1x5xf32>
      tpu.vector_store %arg7[%c0_160, %c0_161], %319 {strides = array<i32>} : memref<1x5xf32, #tpu.memory_space<vmem>>, vector<1x5xf32>,
      %c0_162 = arith.constant 0 : index
      %c0_163 = arith.constant 0 : index
      %322 = vector.load %arg8[%c0_162, %c0_163] : memref<1x5xf32, #tpu.memory_space<vmem>>, vector<1x5xf32>
      tpu.vector_store %arg8[%c0_162, %c0_163], %319 {strides = array<i32>} : memref<1x5xf32, #tpu.memory_space<vmem>>, vector<1x5xf32>,
      %cst_164 = arith.constant 0.000000e+00 : f32
      %323 = vector.broadcast %cst_164 : f32 to vector<1x5xf32>
      %c0_165 = arith.constant 0 : index
      %c0_166 = arith.constant 0 : index
      %324 = vector.load %arg9[%c0_165, %c0_166] : memref<1x5xf32, #tpu.memory_space<vmem>>, vector<1x5xf32>
      tpu.vector_store %arg9[%c0_165, %c0_166], %323 {strides = array<i32>} : memref<1x5xf32, #tpu.memory_space<vmem>>, vector<1x5xf32>,
    } else {
    }
    %c0 = arith.constant 0 : index
    %c0_1 = arith.constant 0 : index
    %4 = vector.load %arg2[%c0, %c0_1] : memref<16x256xf32, #tpu.memory_space<vmem>>, vector<16x256xf32>
    %c0_2 = arith.constant 0 : index
    %c0_3 = arith.constant 0 : index
    %5 = vector.load %arg4[%c0_2, %c0_3] : memref<1x5xi32, #tpu.memory_space<vmem>>, vector<1x5xi32>
    %6 = tpu.iota {dimensions = array<i32: 0>} : vector<16x1xi32>
    %7 = vector.broadcast %0 : i32 to vector<16x1xi32>
    %8 = arith.addi %6, %7 : vector<16x1xi32>
    %c21_i32 = arith.constant 21 : i32
    %9 = vector.broadcast %c21_i32 : i32 to vector<16x1xi32>
    %10 = arith.cmpi slt, %8, %9 : vector<16x1xi32>
    %11 = tpu.iota {dimensions = array<i32: 1>} : vector<1x5xi32>
    %12 = vector.broadcast %8 : vector<16x1xi32> to vector<16x5xi32>
    %13 = vector.broadcast %5 : vector<1x5xi32> to vector<16x5xi32>
    %14 = arith.cmpi eq, %12, %13 : vector<16x5xi32>
    %15 = vector.broadcast %0 : i32 to vector<1x5xi32>
    %16 = arith.cmpi sge, %5, %15 : vector<1x5xi32>
    %c16_i32_4 = arith.constant 16 : i32
    %17 = arith.addi %0, %c16_i32_4 : i32
    %18 = vector.broadcast %17 : i32 to vector<1x5xi32>
    %19 = arith.cmpi slt, %5, %18 : vector<1x5xi32>
    %20 = arith.andi %16, %19 : vector<1x5xi1>
    %c0_i32_5 = arith.constant 0 : i32
    %21 = arith.index_cast %c0_i32_5 : i32 to index
    %c0_6 = arith.constant 0 : index
    %22 = vector.load %arg3[%21, %c0_6] : memref<5x256xf32, #tpu.memory_space<vmem>>, vector<1x256xf32>
    %23 = vector.broadcast %22 : vector<1x256xf32> to vector<16x256xf32>
    %24 = arith.subf %4, %23 : vector<16x256xf32>
    %25 = math.absf %24 : vector<16x256xf32>
    %cst = arith.constant dense<0.000000e+00> : vector<16xf32>
    %26 = vector.multi_reduction <add>, %25, %cst [1] : vector<16x256xf32> to vector<16xf32>
    %27 = vector.shape_cast %26 : vector<16xf32> to vector<16x1xf32>
    %28 = vector.broadcast %c0_i32_5 : i32 to vector<1x5xi32>
    %29 = arith.cmpi eq, %11, %28 : vector<1x5xi32>
    %30 = arith.index_cast %c0_i32_5 : i32 to index
    %31 = memref.load %arg1[%30] : memref<5xi32, #tpu.memory_space<smem>>
    %cst_7 = arith.constant 1.000000e+30 : f32
    %32 = vector.broadcast %cst_7 : f32 to vector<16x1xf32>
    %33 = arith.select %10, %27, %32 : vector<16x1xi1>, vector<16x1xf32>
    %cst_8 = arith.constant dense<0x7F800000> : vector<1xf32>
    %34 = vector.multi_reduction <minimumf>, %33, %cst_8 [0] : vector<16x1xf32> to vector<1xf32>
    %35 = vector.shape_cast %34 : vector<1xf32> to vector<1x1xf32>
    %c0_9 = arith.constant 0 : index
    %c0_10 = arith.constant 0 : index
    %36 = vector.load %arg6[%c0_9, %c0_10] : memref<1x5xf32, #tpu.memory_space<vmem>>, vector<1x5xf32>
    %37 = vector.broadcast %35 : vector<1x1xf32> to vector<1x5xf32>
    %38 = arith.minimumf %36, %37 : vector<1x5xf32>
    %c0_11 = arith.constant 0 : index
    %c0_12 = arith.constant 0 : index
    %39 = vector.load %arg6[%c0_11, %c0_12] : memref<1x5xf32, #tpu.memory_space<vmem>>, vector<1x5xf32>
    %40 = arith.select %29, %38, %39 : vector<1x5xi1>, vector<1x5xf32>
    %c0_13 = arith.constant 0 : index
    %c0_14 = arith.constant 0 : index
    %41 = vector.load %arg6[%c0_13, %c0_14] : memref<1x5xf32, #tpu.memory_space<vmem>>, vector<1x5xf32>
    tpu.vector_store %arg6[%c0_13, %c0_14], %40 {strides = array<i32>} : memref<1x5xf32, #tpu.memory_space<vmem>>, vector<1x5xf32>,
    %42 = vector.broadcast %31 : i32 to vector<16x1xi32>
    %43 = arith.cmpi ne, %8, %42 : vector<16x1xi32>
    %44 = arith.andi %10, %43 : vector<16x1xi1>
    %cst_15 = arith.constant 1.000000e+30 : f32
    %45 = vector.broadcast %cst_15 : f32 to vector<16x1xf32>
    %46 = arith.select %44, %27, %45 : vector<16x1xi1>, vector<16x1xf32>
    %cst_16 = arith.constant dense<0x7F800000> : vector<1xf32>
    %47 = vector.multi_reduction <minimumf>, %46, %cst_16 [0] : vector<16x1xf32> to vector<1xf32>
    %48 = vector.shape_cast %47 : vector<1xf32> to vector<1x1xf32>
    %c0_17 = arith.constant 0 : index
    %c0_18 = arith.constant 0 : index
    %49 = vector.load %arg7[%c0_17, %c0_18] : memref<1x5xf32, #tpu.memory_space<vmem>>, vector<1x5xf32>
    %50 = vector.broadcast %48 : vector<1x1xf32> to vector<1x5xf32>
    %51 = arith.minimumf %49, %50 : vector<1x5xf32>
    %c0_19 = arith.constant 0 : index
    %c0_20 = arith.constant 0 : index
    %52 = vector.load %arg7[%c0_19, %c0_20] : memref<1x5xf32, #tpu.memory_space<vmem>>, vector<1x5xf32>
    %53 = arith.select %29, %51, %52 : vector<1x5xi1>, vector<1x5xf32>
    %c0_21 = arith.constant 0 : index
    %c0_22 = arith.constant 0 : index
    %54 = vector.load %arg7[%c0_21, %c0_22] : memref<1x5xf32, #tpu.memory_space<vmem>>, vector<1x5xf32>
    tpu.vector_store %arg7[%c0_21, %c0_22], %53 {strides = array<i32>} : memref<1x5xf32, #tpu.memory_space<vmem>>, vector<1x5xf32>,
    %cst_23 = arith.constant 0.000000e+00 : f32
    %55 = vector.shape_cast %27 : vector<16x1xf32> to vector<16x1xf32>
    %56 = vector.broadcast %55 : vector<16x1xf32> to vector<16x5xf32>
    %57 = vector.broadcast %cst_23 : f32 to vector<16x5xf32>
    %58 = arith.select %14, %56, %57 : vector<16x5xi1>, vector<16x5xf32>
    %cst_24 = arith.constant dense<0.000000e+00> : vector<5xf32>
    %59 = vector.multi_reduction <add>, %58, %cst_24 [0] : vector<16x5xf32> to vector<5xf32>
    %60 = vector.shape_cast %59 : vector<5xf32> to vector<1x5xf32>
    %61 = vector.broadcast %c0_i32_5 : i32 to vector<1x5xi32>
    %62 = arith.cmpi ne, %11, %61 : vector<1x5xi32>
    %63 = arith.andi %20, %62 : vector<1x5xi1>
    %cst_25 = arith.constant 1.000000e+30 : f32
    %64 = vector.broadcast %cst_25 : f32 to vector<1x5xf32>
    %65 = arith.select %63, %60, %64 : vector<1x5xi1>, vector<1x5xf32>
    %c0_26 = arith.constant 0 : index
    %c0_27 = arith.constant 0 : index
    %66 = vector.load %arg8[%c0_26, %c0_27] : memref<1x5xf32, #tpu.memory_space<vmem>>, vector<1x5xf32>
    %67 = arith.minimumf %66, %65 : vector<1x5xf32>
    %c0_28 = arith.constant 0 : index
    %c0_29 = arith.constant 0 : index
    %68 = vector.load %arg8[%c0_28, %c0_29] : memref<1x5xf32, #tpu.memory_space<vmem>>, vector<1x5xf32>
    tpu.vector_store %arg8[%c0_28, %c0_29], %67 {strides = array<i32>} : memref<1x5xf32, #tpu.memory_space<vmem>>, vector<1x5xf32>,
    %69 = arith.sitofp %31 : i32 to f32
    %70 = vector.broadcast %69 : f32 to vector<1x256xf32>
    %71 = arith.subf %22, %70 : vector<1x256xf32>
    %72 = math.absf %71 : vector<1x256xf32>
    %cst_30 = arith.constant dense<0.000000e+00> : vector<1xf32>
    %73 = vector.multi_reduction <add>, %72, %cst_30 [1] : vector<1x256xf32> to vector<1xf32>
    %74 = vector.shape_cast %73 : vector<1xf32> to vector<1x1xf32>
    %c0_31 = arith.constant 0 : index
    %c0_32 = arith.constant 0 : index
    %75 = vector.load %arg9[%c0_31, %c0_32] : memref<1x5xf32, #tpu.memory_space<vmem>>, vector<1x5xf32>
    %76 = vector.shape_cast %74 : vector<1x1xf32> to vector<1x1xf32>
    %77 = vector.broadcast %76 : vector<1x1xf32> to vector<1x5xf32>
    %78 = arith.select %29, %77, %75 : vector<1x5xi1>, vector<1x5xf32>
    %c0_33 = arith.constant 0 : index
    %c0_34 = arith.constant 0 : index
    %79 = vector.load %arg9[%c0_33, %c0_34] : memref<1x5xf32, #tpu.memory_space<vmem>>, vector<1x5xf32>
    tpu.vector_store %arg9[%c0_33, %c0_34], %78 {strides = array<i32>} : memref<1x5xf32, #tpu.memory_space<vmem>>, vector<1x5xf32>,
    %c1_i32 = arith.constant 1 : i32
    %80 = arith.index_cast %c1_i32 : i32 to index
    %c0_35 = arith.constant 0 : index
    %81 = vector.load %arg3[%80, %c0_35] : memref<5x256xf32, #tpu.memory_space<vmem>>, vector<1x256xf32>
    %82 = vector.broadcast %81 : vector<1x256xf32> to vector<16x256xf32>
    %83 = arith.subf %4, %82 : vector<16x256xf32>
    %84 = math.absf %83 : vector<16x256xf32>
    %cst_36 = arith.constant dense<0.000000e+00> : vector<16xf32>
    %85 = vector.multi_reduction <add>, %84, %cst_36 [1] : vector<16x256xf32> to vector<16xf32>
    %86 = vector.shape_cast %85 : vector<16xf32> to vector<16x1xf32>
    %87 = vector.broadcast %c1_i32 : i32 to vector<1x5xi32>
    %88 = arith.cmpi eq, %11, %87 : vector<1x5xi32>
    %89 = arith.index_cast %c1_i32 : i32 to index
    %90 = memref.load %arg1[%89] : memref<5xi32, #tpu.memory_space<smem>>
    %cst_37 = arith.constant 1.000000e+30 : f32
    %91 = vector.broadcast %cst_37 : f32 to vector<16x1xf32>
    %92 = arith.select %10, %86, %91 : vector<16x1xi1>, vector<16x1xf32>
    %cst_38 = arith.constant dense<0x7F800000> : vector<1xf32>
    %93 = vector.multi_reduction <minimumf>, %92, %cst_38 [0] : vector<16x1xf32> to vector<1xf32>
    %94 = vector.shape_cast %93 : vector<1xf32> to vector<1x1xf32>
    %c0_39 = arith.constant 0 : index
    %c0_40 = arith.constant 0 : index
    %95 = vector.load %arg6[%c0_39, %c0_40] : memref<1x5xf32, #tpu.memory_space<vmem>>, vector<1x5xf32>
    %96 = vector.broadcast %94 : vector<1x1xf32> to vector<1x5xf32>
    %97 = arith.minimumf %95, %96 : vector<1x5xf32>
    %c0_41 = arith.constant 0 : index
    %c0_42 = arith.constant 0 : index
    %98 = vector.load %arg6[%c0_41, %c0_42] : memref<1x5xf32, #tpu.memory_space<vmem>>, vector<1x5xf32>
    %99 = arith.select %88, %97, %98 : vector<1x5xi1>, vector<1x5xf32>
    %c0_43 = arith.constant 0 : index
    %c0_44 = arith.constant 0 : index
    %100 = vector.load %arg6[%c0_43, %c0_44] : memref<1x5xf32, #tpu.memory_space<vmem>>, vector<1x5xf32>
    tpu.vector_store %arg6[%c0_43, %c0_44], %99 {strides = array<i32>} : memref<1x5xf32, #tpu.memory_space<vmem>>, vector<1x5xf32>,
    %101 = vector.broadcast %90 : i32 to vector<16x1xi32>
    %102 = arith.cmpi ne, %8, %101 : vector<16x1xi32>
    %103 = arith.andi %10, %102 : vector<16x1xi1>
    %cst_45 = arith.constant 1.000000e+30 : f32
    %104 = vector.broadcast %cst_45 : f32 to vector<16x1xf32>
    %105 = arith.select %103, %86, %104 : vector<16x1xi1>, vector<16x1xf32>
    %cst_46 = arith.constant dense<0x7F800000> : vector<1xf32>
    %106 = vector.multi_reduction <minimumf>, %105, %cst_46 [0] : vector<16x1xf32> to vector<1xf32>
    %107 = vector.shape_cast %106 : vector<1xf32> to vector<1x1xf32>
    %c0_47 = arith.constant 0 : index
    %c0_48 = arith.constant 0 : index
    %108 = vector.load %arg7[%c0_47, %c0_48] : memref<1x5xf32, #tpu.memory_space<vmem>>, vector<1x5xf32>
    %109 = vector.broadcast %107 : vector<1x1xf32> to vector<1x5xf32>
    %110 = arith.minimumf %108, %109 : vector<1x5xf32>
    %c0_49 = arith.constant 0 : index
    %c0_50 = arith.constant 0 : index
    %111 = vector.load %arg7[%c0_49, %c0_50] : memref<1x5xf32, #tpu.memory_space<vmem>>, vector<1x5xf32>
    %112 = arith.select %88, %110, %111 : vector<1x5xi1>, vector<1x5xf32>
    %c0_51 = arith.constant 0 : index
    %c0_52 = arith.constant 0 : index
    %113 = vector.load %arg7[%c0_51, %c0_52] : memref<1x5xf32, #tpu.memory_space<vmem>>, vector<1x5xf32>
    tpu.vector_store %arg7[%c0_51, %c0_52], %112 {strides = array<i32>} : memref<1x5xf32, #tpu.memory_space<vmem>>, vector<1x5xf32>,
    %cst_53 = arith.constant 0.000000e+00 : f32
    %114 = vector.shape_cast %86 : vector<16x1xf32> to vector<16x1xf32>
    %115 = vector.broadcast %114 : vector<16x1xf32> to vector<16x5xf32>
    %116 = vector.broadcast %cst_53 : f32 to vector<16x5xf32>
    %117 = arith.select %14, %115, %116 : vector<16x5xi1>, vector<16x5xf32>
    %cst_54 = arith.constant dense<0.000000e+00> : vector<5xf32>
    %118 = vector.multi_reduction <add>, %117, %cst_54 [0] : vector<16x5xf32> to vector<5xf32>
    %119 = vector.shape_cast %118 : vector<5xf32> to vector<1x5xf32>
    %120 = vector.broadcast %c1_i32 : i32 to vector<1x5xi32>
    %121 = arith.cmpi ne, %11, %120 : vector<1x5xi32>
    %122 = arith.andi %20, %121 : vector<1x5xi1>
    %cst_55 = arith.constant 1.000000e+30 : f32
    %123 = vector.broadcast %cst_55 : f32 to vector<1x5xf32>
    %124 = arith.select %122, %119, %123 : vector<1x5xi1>, vector<1x5xf32>
    %c0_56 = arith.constant 0 : index
    %c0_57 = arith.constant 0 : index
    %125 = vector.load %arg8[%c0_56, %c0_57] : memref<1x5xf32, #tpu.memory_space<vmem>>, vector<1x5xf32>
    %126 = arith.minimumf %125, %124 : vector<1x5xf32>
    %c0_58 = arith.constant 0 : index
    %c0_59 = arith.constant 0 : index
    %127 = vector.load %arg8[%c0_58, %c0_59] : memref<1x5xf32, #tpu.memory_space<vmem>>, vector<1x5xf32>
    tpu.vector_store %arg8[%c0_58, %c0_59], %126 {strides = array<i32>} : memref<1x5xf32, #tpu.memory_space<vmem>>, vector<1x5xf32>,
    %128 = arith.sitofp %90 : i32 to f32
    %129 = vector.broadcast %128 : f32 to vector<1x256xf32>
    %130 = arith.subf %81, %129 : vector<1x256xf32>
    %131 = math.absf %130 : vector<1x256xf32>
    %cst_60 = arith.constant dense<0.000000e+00> : vector<1xf32>
    %132 = vector.multi_reduction <add>, %131, %cst_60 [1] : vector<1x256xf32> to vector<1xf32>
    %133 = vector.shape_cast %132 : vector<1xf32> to vector<1x1xf32>
    %c0_61 = arith.constant 0 : index
    %c0_62 = arith.constant 0 : index
    %134 = vector.load %arg9[%c0_61, %c0_62] : memref<1x5xf32, #tpu.memory_space<vmem>>, vector<1x5xf32>
    %135 = vector.shape_cast %133 : vector<1x1xf32> to vector<1x1xf32>
    %136 = vector.broadcast %135 : vector<1x1xf32> to vector<1x5xf32>
    %137 = arith.select %88, %136, %134 : vector<1x5xi1>, vector<1x5xf32>
    %c0_63 = arith.constant 0 : index
    %c0_64 = arith.constant 0 : index
    %138 = vector.load %arg9[%c0_63, %c0_64] : memref<1x5xf32, #tpu.memory_space<vmem>>, vector<1x5xf32>
    tpu.vector_store %arg9[%c0_63, %c0_64], %137 {strides = array<i32>} : memref<1x5xf32, #tpu.memory_space<vmem>>, vector<1x5xf32>,
    %c2_i32 = arith.constant 2 : i32
    %139 = arith.index_cast %c2_i32 : i32 to index
    %c0_65 = arith.constant 0 : index
    %140 = vector.load %arg3[%139, %c0_65] : memref<5x256xf32, #tpu.memory_space<vmem>>, vector<1x256xf32>
    %141 = vector.broadcast %140 : vector<1x256xf32> to vector<16x256xf32>
    %142 = arith.subf %4, %141 : vector<16x256xf32>
    %143 = math.absf %142 : vector<16x256xf32>
    %cst_66 = arith.constant dense<0.000000e+00> : vector<16xf32>
    %144 = vector.multi_reduction <add>, %143, %cst_66 [1] : vector<16x256xf32> to vector<16xf32>
    %145 = vector.shape_cast %144 : vector<16xf32> to vector<16x1xf32>
    %146 = vector.broadcast %c2_i32 : i32 to vector<1x5xi32>
    %147 = arith.cmpi eq, %11, %146 : vector<1x5xi32>
    %148 = arith.index_cast %c2_i32 : i32 to index
    %149 = memref.load %arg1[%148] : memref<5xi32, #tpu.memory_space<smem>>
    %cst_67 = arith.constant 1.000000e+30 : f32
    %150 = vector.broadcast %cst_67 : f32 to vector<16x1xf32>
    %151 = arith.select %10, %145, %150 : vector<16x1xi1>, vector<16x1xf32>
    %cst_68 = arith.constant dense<0x7F800000> : vector<1xf32>
    %152 = vector.multi_reduction <minimumf>, %151, %cst_68 [0] : vector<16x1xf32> to vector<1xf32>
    %153 = vector.shape_cast %152 : vector<1xf32> to vector<1x1xf32>
    %c0_69 = arith.constant 0 : index
    %c0_70 = arith.constant 0 : index
    %154 = vector.load %arg6[%c0_69, %c0_70] : memref<1x5xf32, #tpu.memory_space<vmem>>, vector<1x5xf32>
    %155 = vector.broadcast %153 : vector<1x1xf32> to vector<1x5xf32>
    %156 = arith.minimumf %154, %155 : vector<1x5xf32>
    %c0_71 = arith.constant 0 : index
    %c0_72 = arith.constant 0 : index
    %157 = vector.load %arg6[%c0_71, %c0_72] : memref<1x5xf32, #tpu.memory_space<vmem>>, vector<1x5xf32>
    %158 = arith.select %147, %156, %157 : vector<1x5xi1>, vector<1x5xf32>
    %c0_73 = arith.constant 0 : index
    %c0_74 = arith.constant 0 : index
    %159 = vector.load %arg6[%c0_73, %c0_74] : memref<1x5xf32, #tpu.memory_space<vmem>>, vector<1x5xf32>
    tpu.vector_store %arg6[%c0_73, %c0_74], %158 {strides = array<i32>} : memref<1x5xf32, #tpu.memory_space<vmem>>, vector<1x5xf32>,
    %160 = vector.broadcast %149 : i32 to vector<16x1xi32>
    %161 = arith.cmpi ne, %8, %160 : vector<16x1xi32>
    %162 = arith.andi %10, %161 : vector<16x1xi1>
    %cst_75 = arith.constant 1.000000e+30 : f32
    %163 = vector.broadcast %cst_75 : f32 to vector<16x1xf32>
    %164 = arith.select %162, %145, %163 : vector<16x1xi1>, vector<16x1xf32>
    %cst_76 = arith.constant dense<0x7F800000> : vector<1xf32>
    %165 = vector.multi_reduction <minimumf>, %164, %cst_76 [0] : vector<16x1xf32> to vector<1xf32>
    %166 = vector.shape_cast %165 : vector<1xf32> to vector<1x1xf32>
    %c0_77 = arith.constant 0 : index
    %c0_78 = arith.constant 0 : index
    %167 = vector.load %arg7[%c0_77, %c0_78] : memref<1x5xf32, #tpu.memory_space<vmem>>, vector<1x5xf32>
    %168 = vector.broadcast %166 : vector<1x1xf32> to vector<1x5xf32>
    %169 = arith.minimumf %167, %168 : vector<1x5xf32>
    %c0_79 = arith.constant 0 : index
    %c0_80 = arith.constant 0 : index
    %170 = vector.load %arg7[%c0_79, %c0_80] : memref<1x5xf32, #tpu.memory_space<vmem>>, vector<1x5xf32>
    %171 = arith.select %147, %169, %170 : vector<1x5xi1>, vector<1x5xf32>
    %c0_81 = arith.constant 0 : index
    %c0_82 = arith.constant 0 : index
    %172 = vector.load %arg7[%c0_81, %c0_82] : memref<1x5xf32, #tpu.memory_space<vmem>>, vector<1x5xf32>
    tpu.vector_store %arg7[%c0_81, %c0_82], %171 {strides = array<i32>} : memref<1x5xf32, #tpu.memory_space<vmem>>, vector<1x5xf32>,
    %cst_83 = arith.constant 0.000000e+00 : f32
    %173 = vector.shape_cast %145 : vector<16x1xf32> to vector<16x1xf32>
    %174 = vector.broadcast %173 : vector<16x1xf32> to vector<16x5xf32>
    %175 = vector.broadcast %cst_83 : f32 to vector<16x5xf32>
    %176 = arith.select %14, %174, %175 : vector<16x5xi1>, vector<16x5xf32>
    %cst_84 = arith.constant dense<0.000000e+00> : vector<5xf32>
    %177 = vector.multi_reduction <add>, %176, %cst_84 [0] : vector<16x5xf32> to vector<5xf32>
    %178 = vector.shape_cast %177 : vector<5xf32> to vector<1x5xf32>
    %179 = vector.broadcast %c2_i32 : i32 to vector<1x5xi32>
    %180 = arith.cmpi ne, %11, %179 : vector<1x5xi32>
    %181 = arith.andi %20, %180 : vector<1x5xi1>
    %cst_85 = arith.constant 1.000000e+30 : f32
    %182 = vector.broadcast %cst_85 : f32 to vector<1x5xf32>
    %183 = arith.select %181, %178, %182 : vector<1x5xi1>, vector<1x5xf32>
    %c0_86 = arith.constant 0 : index
    %c0_87 = arith.constant 0 : index
    %184 = vector.load %arg8[%c0_86, %c0_87] : memref<1x5xf32, #tpu.memory_space<vmem>>, vector<1x5xf32>
    %185 = arith.minimumf %184, %183 : vector<1x5xf32>
    %c0_88 = arith.constant 0 : index
    %c0_89 = arith.constant 0 : index
    %186 = vector.load %arg8[%c0_88, %c0_89] : memref<1x5xf32, #tpu.memory_space<vmem>>, vector<1x5xf32>
    tpu.vector_store %arg8[%c0_88, %c0_89], %185 {strides = array<i32>} : memref<1x5xf32, #tpu.memory_space<vmem>>, vector<1x5xf32>,
    %187 = arith.sitofp %149 : i32 to f32
    %188 = vector.broadcast %187 : f32 to vector<1x256xf32>
    %189 = arith.subf %140, %188 : vector<1x256xf32>
    %190 = math.absf %189 : vector<1x256xf32>
    %cst_90 = arith.constant dense<0.000000e+00> : vector<1xf32>
    %191 = vector.multi_reduction <add>, %190, %cst_90 [1] : vector<1x256xf32> to vector<1xf32>
    %192 = vector.shape_cast %191 : vector<1xf32> to vector<1x1xf32>
    %c0_91 = arith.constant 0 : index
    %c0_92 = arith.constant 0 : index
    %193 = vector.load %arg9[%c0_91, %c0_92] : memref<1x5xf32, #tpu.memory_space<vmem>>, vector<1x5xf32>
    %194 = vector.shape_cast %192 : vector<1x1xf32> to vector<1x1xf32>
    %195 = vector.broadcast %194 : vector<1x1xf32> to vector<1x5xf32>
    %196 = arith.select %147, %195, %193 : vector<1x5xi1>, vector<1x5xf32>
    %c0_93 = arith.constant 0 : index
    %c0_94 = arith.constant 0 : index
    %197 = vector.load %arg9[%c0_93, %c0_94] : memref<1x5xf32, #tpu.memory_space<vmem>>, vector<1x5xf32>
    tpu.vector_store %arg9[%c0_93, %c0_94], %196 {strides = array<i32>} : memref<1x5xf32, #tpu.memory_space<vmem>>, vector<1x5xf32>,
    %c3_i32 = arith.constant 3 : i32
    %198 = arith.index_cast %c3_i32 : i32 to index
    %c0_95 = arith.constant 0 : index
    %199 = vector.load %arg3[%198, %c0_95] : memref<5x256xf32, #tpu.memory_space<vmem>>, vector<1x256xf32>
    %200 = vector.broadcast %199 : vector<1x256xf32> to vector<16x256xf32>
    %201 = arith.subf %4, %200 : vector<16x256xf32>
    %202 = math.absf %201 : vector<16x256xf32>
    %cst_96 = arith.constant dense<0.000000e+00> : vector<16xf32>
    %203 = vector.multi_reduction <add>, %202, %cst_96 [1] : vector<16x256xf32> to vector<16xf32>
    %204 = vector.shape_cast %203 : vector<16xf32> to vector<16x1xf32>
    %205 = vector.broadcast %c3_i32 : i32 to vector<1x5xi32>
    %206 = arith.cmpi eq, %11, %205 : vector<1x5xi32>
    %207 = arith.index_cast %c3_i32 : i32 to index
    %208 = memref.load %arg1[%207] : memref<5xi32, #tpu.memory_space<smem>>
    %cst_97 = arith.constant 1.000000e+30 : f32
    %209 = vector.broadcast %cst_97 : f32 to vector<16x1xf32>
    %210 = arith.select %10, %204, %209 : vector<16x1xi1>, vector<16x1xf32>
    %cst_98 = arith.constant dense<0x7F800000> : vector<1xf32>
    %211 = vector.multi_reduction <minimumf>, %210, %cst_98 [0] : vector<16x1xf32> to vector<1xf32>
    %212 = vector.shape_cast %211 : vector<1xf32> to vector<1x1xf32>
    %c0_99 = arith.constant 0 : index
    %c0_100 = arith.constant 0 : index
    %213 = vector.load %arg6[%c0_99, %c0_100] : memref<1x5xf32, #tpu.memory_space<vmem>>, vector<1x5xf32>
    %214 = vector.broadcast %212 : vector<1x1xf32> to vector<1x5xf32>
    %215 = arith.minimumf %213, %214 : vector<1x5xf32>
    %c0_101 = arith.constant 0 : index
    %c0_102 = arith.constant 0 : index
    %216 = vector.load %arg6[%c0_101, %c0_102] : memref<1x5xf32, #tpu.memory_space<vmem>>, vector<1x5xf32>
    %217 = arith.select %206, %215, %216 : vector<1x5xi1>, vector<1x5xf32>
    %c0_103 = arith.constant 0 : index
    %c0_104 = arith.constant 0 : index
    %218 = vector.load %arg6[%c0_103, %c0_104] : memref<1x5xf32, #tpu.memory_space<vmem>>, vector<1x5xf32>
    tpu.vector_store %arg6[%c0_103, %c0_104], %217 {strides = array<i32>} : memref<1x5xf32, #tpu.memory_space<vmem>>, vector<1x5xf32>,
    %219 = vector.broadcast %208 : i32 to vector<16x1xi32>
    %220 = arith.cmpi ne, %8, %219 : vector<16x1xi32>
    %221 = arith.andi %10, %220 : vector<16x1xi1>
    %cst_105 = arith.constant 1.000000e+30 : f32
    %222 = vector.broadcast %cst_105 : f32 to vector<16x1xf32>
    %223 = arith.select %221, %204, %222 : vector<16x1xi1>, vector<16x1xf32>
    %cst_106 = arith.constant dense<0x7F800000> : vector<1xf32>
    %224 = vector.multi_reduction <minimumf>, %223, %cst_106 [0] : vector<16x1xf32> to vector<1xf32>
    %225 = vector.shape_cast %224 : vector<1xf32> to vector<1x1xf32>
    %c0_107 = arith.constant 0 : index
    %c0_108 = arith.constant 0 : index
    %226 = vector.load %arg7[%c0_107, %c0_108] : memref<1x5xf32, #tpu.memory_space<vmem>>, vector<1x5xf32>
    %227 = vector.broadcast %225 : vector<1x1xf32> to vector<1x5xf32>
    %228 = arith.minimumf %226, %227 : vector<1x5xf32>
    %c0_109 = arith.constant 0 : index
    %c0_110 = arith.constant 0 : index
    %229 = vector.load %arg7[%c0_109, %c0_110] : memref<1x5xf32, #tpu.memory_space<vmem>>, vector<1x5xf32>
    %230 = arith.select %206, %228, %229 : vector<1x5xi1>, vector<1x5xf32>
    %c0_111 = arith.constant 0 : index
    %c0_112 = arith.constant 0 : index
    %231 = vector.load %arg7[%c0_111, %c0_112] : memref<1x5xf32, #tpu.memory_space<vmem>>, vector<1x5xf32>
    tpu.vector_store %arg7[%c0_111, %c0_112], %230 {strides = array<i32>} : memref<1x5xf32, #tpu.memory_space<vmem>>, vector<1x5xf32>,
    %cst_113 = arith.constant 0.000000e+00 : f32
    %232 = vector.shape_cast %204 : vector<16x1xf32> to vector<16x1xf32>
    %233 = vector.broadcast %232 : vector<16x1xf32> to vector<16x5xf32>
    %234 = vector.broadcast %cst_113 : f32 to vector<16x5xf32>
    %235 = arith.select %14, %233, %234 : vector<16x5xi1>, vector<16x5xf32>
    %cst_114 = arith.constant dense<0.000000e+00> : vector<5xf32>
    %236 = vector.multi_reduction <add>, %235, %cst_114 [0] : vector<16x5xf32> to vector<5xf32>
    %237 = vector.shape_cast %236 : vector<5xf32> to vector<1x5xf32>
    %238 = vector.broadcast %c3_i32 : i32 to vector<1x5xi32>
    %239 = arith.cmpi ne, %11, %238 : vector<1x5xi32>
    %240 = arith.andi %20, %239 : vector<1x5xi1>
    %cst_115 = arith.constant 1.000000e+30 : f32
    %241 = vector.broadcast %cst_115 : f32 to vector<1x5xf32>
    %242 = arith.select %240, %237, %241 : vector<1x5xi1>, vector<1x5xf32>
    %c0_116 = arith.constant 0 : index
    %c0_117 = arith.constant 0 : index
    %243 = vector.load %arg8[%c0_116, %c0_117] : memref<1x5xf32, #tpu.memory_space<vmem>>, vector<1x5xf32>
    %244 = arith.minimumf %243, %242 : vector<1x5xf32>
    %c0_118 = arith.constant 0 : index
    %c0_119 = arith.constant 0 : index
    %245 = vector.load %arg8[%c0_118, %c0_119] : memref<1x5xf32, #tpu.memory_space<vmem>>, vector<1x5xf32>
    tpu.vector_store %arg8[%c0_118, %c0_119], %244 {strides = array<i32>} : memref<1x5xf32, #tpu.memory_space<vmem>>, vector<1x5xf32>,
    %246 = arith.sitofp %208 : i32 to f32
    %247 = vector.broadcast %246 : f32 to vector<1x256xf32>
    %248 = arith.subf %199, %247 : vector<1x256xf32>
    %249 = math.absf %248 : vector<1x256xf32>
    %cst_120 = arith.constant dense<0.000000e+00> : vector<1xf32>
    %250 = vector.multi_reduction <add>, %249, %cst_120 [1] : vector<1x256xf32> to vector<1xf32>
    %251 = vector.shape_cast %250 : vector<1xf32> to vector<1x1xf32>
    %c0_121 = arith.constant 0 : index
    %c0_122 = arith.constant 0 : index
    %252 = vector.load %arg9[%c0_121, %c0_122] : memref<1x5xf32, #tpu.memory_space<vmem>>, vector<1x5xf32>
    %253 = vector.shape_cast %251 : vector<1x1xf32> to vector<1x1xf32>
    %254 = vector.broadcast %253 : vector<1x1xf32> to vector<1x5xf32>
    %255 = arith.select %206, %254, %252 : vector<1x5xi1>, vector<1x5xf32>
    %c0_123 = arith.constant 0 : index
    %c0_124 = arith.constant 0 : index
    %256 = vector.load %arg9[%c0_123, %c0_124] : memref<1x5xf32, #tpu.memory_space<vmem>>, vector<1x5xf32>
    tpu.vector_store %arg9[%c0_123, %c0_124], %255 {strides = array<i32>} : memref<1x5xf32, #tpu.memory_space<vmem>>, vector<1x5xf32>,
    %c4_i32 = arith.constant 4 : i32
    %257 = arith.index_cast %c4_i32 : i32 to index
    %c0_125 = arith.constant 0 : index
    %258 = vector.load %arg3[%257, %c0_125] : memref<5x256xf32, #tpu.memory_space<vmem>>, vector<1x256xf32>
    %259 = vector.broadcast %258 : vector<1x256xf32> to vector<16x256xf32>
    %260 = arith.subf %4, %259 : vector<16x256xf32>
    %261 = math.absf %260 : vector<16x256xf32>
    %cst_126 = arith.constant dense<0.000000e+00> : vector<16xf32>
    %262 = vector.multi_reduction <add>, %261, %cst_126 [1] : vector<16x256xf32> to vector<16xf32>
    %263 = vector.shape_cast %262 : vector<16xf32> to vector<16x1xf32>
    %264 = vector.broadcast %c4_i32 : i32 to vector<1x5xi32>
    %265 = arith.cmpi eq, %11, %264 : vector<1x5xi32>
    %266 = arith.index_cast %c4_i32 : i32 to index
    %267 = memref.load %arg1[%266] : memref<5xi32, #tpu.memory_space<smem>>
    %cst_127 = arith.constant 1.000000e+30 : f32
    %268 = vector.broadcast %cst_127 : f32 to vector<16x1xf32>
    %269 = arith.select %10, %263, %268 : vector<16x1xi1>, vector<16x1xf32>
    %cst_128 = arith.constant dense<0x7F800000> : vector<1xf32>
    %270 = vector.multi_reduction <minimumf>, %269, %cst_128 [0] : vector<16x1xf32> to vector<1xf32>
    %271 = vector.shape_cast %270 : vector<1xf32> to vector<1x1xf32>
    %c0_129 = arith.constant 0 : index
    %c0_130 = arith.constant 0 : index
    %272 = vector.load %arg6[%c0_129, %c0_130] : memref<1x5xf32, #tpu.memory_space<vmem>>, vector<1x5xf32>
    %273 = vector.broadcast %271 : vector<1x1xf32> to vector<1x5xf32>
    %274 = arith.minimumf %272, %273 : vector<1x5xf32>
    %c0_131 = arith.constant 0 : index
    %c0_132 = arith.constant 0 : index
    %275 = vector.load %arg6[%c0_131, %c0_132] : memref<1x5xf32, #tpu.memory_space<vmem>>, vector<1x5xf32>
    %276 = arith.select %265, %274, %275 : vector<1x5xi1>, vector<1x5xf32>
    %c0_133 = arith.constant 0 : index
    %c0_134 = arith.constant 0 : index
    %277 = vector.load %arg6[%c0_133, %c0_134] : memref<1x5xf32, #tpu.memory_space<vmem>>, vector<1x5xf32>
    tpu.vector_store %arg6[%c0_133, %c0_134], %276 {strides = array<i32>} : memref<1x5xf32, #tpu.memory_space<vmem>>, vector<1x5xf32>,
    %278 = vector.broadcast %267 : i32 to vector<16x1xi32>
    %279 = arith.cmpi ne, %8, %278 : vector<16x1xi32>
    %280 = arith.andi %10, %279 : vector<16x1xi1>
    %cst_135 = arith.constant 1.000000e+30 : f32
    %281 = vector.broadcast %cst_135 : f32 to vector<16x1xf32>
    %282 = arith.select %280, %263, %281 : vector<16x1xi1>, vector<16x1xf32>
    %cst_136 = arith.constant dense<0x7F800000> : vector<1xf32>
    %283 = vector.multi_reduction <minimumf>, %282, %cst_136 [0] : vector<16x1xf32> to vector<1xf32>
    %284 = vector.shape_cast %283 : vector<1xf32> to vector<1x1xf32>
    %c0_137 = arith.constant 0 : index
    %c0_138 = arith.constant 0 : index
    %285 = vector.load %arg7[%c0_137, %c0_138] : memref<1x5xf32, #tpu.memory_space<vmem>>, vector<1x5xf32>
    %286 = vector.broadcast %284 : vector<1x1xf32> to vector<1x5xf32>
    %287 = arith.minimumf %285, %286 : vector<1x5xf32>
    %c0_139 = arith.constant 0 : index
    %c0_140 = arith.constant 0 : index
    %288 = vector.load %arg7[%c0_139, %c0_140] : memref<1x5xf32, #tpu.memory_space<vmem>>, vector<1x5xf32>
    %289 = arith.select %265, %287, %288 : vector<1x5xi1>, vector<1x5xf32>
    %c0_141 = arith.constant 0 : index
    %c0_142 = arith.constant 0 : index
    %290 = vector.load %arg7[%c0_141, %c0_142] : memref<1x5xf32, #tpu.memory_space<vmem>>, vector<1x5xf32>
    tpu.vector_store %arg7[%c0_141, %c0_142], %289 {strides = array<i32>} : memref<1x5xf32, #tpu.memory_space<vmem>>, vector<1x5xf32>,
    %cst_143 = arith.constant 0.000000e+00 : f32
    %291 = vector.shape_cast %263 : vector<16x1xf32> to vector<16x1xf32>
    %292 = vector.broadcast %291 : vector<16x1xf32> to vector<16x5xf32>
    %293 = vector.broadcast %cst_143 : f32 to vector<16x5xf32>
    %294 = arith.select %14, %292, %293 : vector<16x5xi1>, vector<16x5xf32>
    %cst_144 = arith.constant dense<0.000000e+00> : vector<5xf32>
    %295 = vector.multi_reduction <add>, %294, %cst_144 [0] : vector<16x5xf32> to vector<5xf32>
    %296 = vector.shape_cast %295 : vector<5xf32> to vector<1x5xf32>
    %297 = vector.broadcast %c4_i32 : i32 to vector<1x5xi32>
    %298 = arith.cmpi ne, %11, %297 : vector<1x5xi32>
    %299 = arith.andi %20, %298 : vector<1x5xi1>
    %cst_145 = arith.constant 1.000000e+30 : f32
    %300 = vector.broadcast %cst_145 : f32 to vector<1x5xf32>
    %301 = arith.select %299, %296, %300 : vector<1x5xi1>, vector<1x5xf32>
    %c0_146 = arith.constant 0 : index
    %c0_147 = arith.constant 0 : index
    %302 = vector.load %arg8[%c0_146, %c0_147] : memref<1x5xf32, #tpu.memory_space<vmem>>, vector<1x5xf32>
    %303 = arith.minimumf %302, %301 : vector<1x5xf32>
    %c0_148 = arith.constant 0 : index
    %c0_149 = arith.constant 0 : index
    %304 = vector.load %arg8[%c0_148, %c0_149] : memref<1x5xf32, #tpu.memory_space<vmem>>, vector<1x5xf32>
    tpu.vector_store %arg8[%c0_148, %c0_149], %303 {strides = array<i32>} : memref<1x5xf32, #tpu.memory_space<vmem>>, vector<1x5xf32>,
    %305 = arith.sitofp %267 : i32 to f32
    %306 = vector.broadcast %305 : f32 to vector<1x256xf32>
    %307 = arith.subf %258, %306 : vector<1x256xf32>
    %308 = math.absf %307 : vector<1x256xf32>
    %cst_150 = arith.constant dense<0.000000e+00> : vector<1xf32>
    %309 = vector.multi_reduction <add>, %308, %cst_150 [1] : vector<1x256xf32> to vector<1xf32>
    %310 = vector.shape_cast %309 : vector<1xf32> to vector<1x1xf32>
    %c0_151 = arith.constant 0 : index
    %c0_152 = arith.constant 0 : index
    %311 = vector.load %arg9[%c0_151, %c0_152] : memref<1x5xf32, #tpu.memory_space<vmem>>, vector<1x5xf32>
    %312 = vector.shape_cast %310 : vector<1x1xf32> to vector<1x1xf32>
    %313 = vector.broadcast %312 : vector<1x1xf32> to vector<1x5xf32>
    %314 = arith.select %265, %313, %311 : vector<1x5xi1>, vector<1x5xf32>
    %c0_153 = arith.constant 0 : index
    %c0_154 = arith.constant 0 : index
    %315 = vector.load %arg9[%c0_153, %c0_154] : memref<1x5xf32, #tpu.memory_space<vmem>>, vector<1x5xf32>
    tpu.vector_store %arg9[%c0_153, %c0_154], %314 {strides = array<i32>} : memref<1x5xf32, #tpu.memory_space<vmem>>, vector<1x5xf32>,
    %c5_i32 = arith.constant 5 : i32
    %c1_i32_155 = arith.constant 1 : i32
    %316 = arith.cmpi eq, %arg0, %c1_i32_155 : i32
    %317 = arith.extui %316 : i1 to i32
    %c0_i32_156 = arith.constant 0 : i32
    %318 = arith.cmpi ne, %317, %c0_i32_156 : i32
    scf.if %318 {
      %c0_i32_157 = arith.constant 0 : i32
      %319 = vector.broadcast %c0_i32_157 : i32 to vector<1x5xi32>
      %320 = arith.cmpi slt, %5, %319 : vector<1x5xi32>
      %c0_158 = arith.constant 0 : index
      %c0_159 = arith.constant 0 : index
      %321 = vector.load %arg6[%c0_158, %c0_159] : memref<1x5xf32, #tpu.memory_space<vmem>>, vector<1x5xf32>
      %cst_160 = arith.constant 3.000000e-01 : f32
      %322 = vector.broadcast %cst_160 : f32 to vector<1x5xf32>
      %323 = arith.addf %321, %322 : vector<1x5xf32>
      %c0_161 = arith.constant 0 : index
      %c0_162 = arith.constant 0 : index
      %324 = vector.load %arg9[%c0_161, %c0_162] : memref<1x5xf32, #tpu.memory_space<vmem>>, vector<1x5xf32>
      %c0_163 = arith.constant 0 : index
      %c0_164 = arith.constant 0 : index
      %325 = vector.load %arg7[%c0_163, %c0_164] : memref<1x5xf32, #tpu.memory_space<vmem>>, vector<1x5xf32>
      %c0_165 = arith.constant 0 : index
      %c0_166 = arith.constant 0 : index
      %326 = vector.load %arg8[%c0_165, %c0_166] : memref<1x5xf32, #tpu.memory_space<vmem>>, vector<1x5xf32>
      %327 = arith.subf %324, %325 : vector<1x5xf32>
      %328 = arith.subf %327, %326 : vector<1x5xf32>
      %cst_167 = arith.constant 3.000000e-01 : f32
      %329 = vector.broadcast %cst_167 : f32 to vector<1x5xf32>
      %330 = arith.addf %328, %329 : vector<1x5xf32>
      %cst_168 = arith.constant 0.000000e+00 : f32
      %331 = vector.broadcast %cst_168 : f32 to vector<1x5xf32>
      %332 = arith.maximumf %330, %331 : vector<1x5xf32>
      %c-1_i32 = arith.constant -1 : i32
      %333 = vector.broadcast %c-1_i32 : i32 to vector<1x5xi32>
      %334 = arith.select %320, %11, %333 : vector<1x5xi1>, vector<1x5xi32>
      %cst_169 = arith.constant dense<-2147483648> : vector<1xi32>
      %335 = vector.multi_reduction <maxsi>, %334, %cst_169 [1] : vector<1x5xi32> to vector<1xi32>
      %336 = vector.shape_cast %335 : vector<1xi32> to vector<1x1xi32>
      %337 = vector.broadcast %336 : vector<1x1xi32> to vector<1x5xi32>
      %338 = arith.cmpi eq, %11, %337 : vector<1x5xi32>
      %cst_170 = arith.constant 0.000000e+00 : f32
      %339 = vector.broadcast %cst_170 : f32 to vector<1x5xf32>
      %340 = arith.select %338, %323, %339 : vector<1x5xi1>, vector<1x5xf32>
      %341 = vector.broadcast %336 : vector<1x1xi32> to vector<1x5xi32>
      %342 = arith.cmpi sgt, %11, %341 : vector<1x5xi32>
      %cst_171 = arith.constant dense<true> : vector<1x5xi1>
      %343 = arith.xori %320, %cst_171 : vector<1x5xi1>
      %344 = arith.andi %342, %343 : vector<1x5xi1>
      %cst_172 = arith.constant 0.000000e+00 : f32
      %345 = vector.broadcast %cst_172 : f32 to vector<1x5xf32>
      %346 = arith.select %344, %332, %345 : vector<1x5xi1>, vector<1x5xf32>
      %347 = arith.addf %340, %346 : vector<1x5xf32>
      %cst_173 = arith.constant dense<0.000000e+00> : vector<1xf32>
      %348 = vector.multi_reduction <add>, %347, %cst_173 [1] : vector<1x5xf32> to vector<1xf32>
      %349 = vector.shape_cast %348 : vector<1xf32> to vector<1x1xf32>
      %c0_174 = arith.constant 0 : index
      %c0_175 = arith.constant 0 : index
      %350 = vector.load %arg5[%c0_174, %c0_175] : memref<1x1xf32, #tpu.memory_space<vmem>>, vector<1x1xf32>
      tpu.vector_store %arg5[%c0_174, %c0_175], %349 {strides = array<i32>} : memref<1x1xf32, #tpu.memory_space<vmem>>, vector<1x1xf32>,
    } else {
    }
    return
  }
  func.func @transform_0(%arg0: i32, %arg1: memref<5xi32, #tpu.memory_space<smem>>) -> (i32, i32) {
    %c0_i32 = arith.constant 0 : i32
    %c0_i32_0 = arith.constant 0 : i32
    return %arg0, %c0_i32 : i32, i32
  }
  func.func @transform_1(%arg0: i32, %arg1: memref<5xi32, #tpu.memory_space<smem>>) -> (i32, i32) {
    %c0_i32 = arith.constant 0 : i32
    %c0_i32_0 = arith.constant 0 : i32
    %c0_i32_1 = arith.constant 0 : i32
    return %c0_i32, %c0_i32_0 : i32, i32
  }
  func.func @transform_2(%arg0: i32, %arg1: memref<5xi32, #tpu.memory_space<smem>>) -> (i32, i32) {
    %c0_i32 = arith.constant 0 : i32
    %c0_i32_0 = arith.constant 0 : i32
    %c0_i32_1 = arith.constant 0 : i32
    return %c0_i32, %c0_i32_0 : i32, i32
  }
  func.func @transform_3(%arg0: i32, %arg1: memref<5xi32, #tpu.memory_space<smem>>) -> (i32, i32) {
    %c0_i32 = arith.constant 0 : i32
    %c0_i32_0 = arith.constant 0 : i32
    %c0_i32_1 = arith.constant 0 : i32
    return %c0_i32, %c0_i32_0 : i32, i32
  }
}

</mosaic_0001>

<llo_original>
// kernel: tpu_custom_call.1
$region0: #{tpu_custom_call.1}
  #allocation0 [shape = 'u32[]', space=smem, size = 0x4, offset = 0x4, fixed_abs, tag = 'smem constant byte address 0x4 - core index']
  #allocation1 [shape = 'u32[144,128]{1,0:T(1,128)}', space=vmem, size = 0x12000, scoped, tag = 'internal scratch']
  #allocation2 [shape = 'f32[1,5]{1,0:T(1,128)}', space=vmem, size = 0x200, scoped, tag = 'scratch operand']
  #allocation3 [shape = 'f32[1,5]{1,0:T(1,128)}', space=vmem, size = 0x200, scoped, tag = 'scratch operand']
  #allocation4 [shape = 'f32[1,5]{1,0:T(1,128)}', space=vmem, size = 0x200, scoped, tag = 'scratch operand']
  #allocation5 [shape = 'f32[1,5]{1,0:T(1,128)}', space=vmem, size = 0x200, scoped, tag = 'scratch operand']
  #allocation6 [shape = 's32[1]{0}', space=sflag, size = 0x4, scoped, tag = 'scoped memory for tpu_custom_call.1']
  #allocation7 [shape = 'u8[512]{0}', space=smem, size = 0x200, scoped, tag = 'prefetched SMEM operand 0']
  %s0 = inlined_call_operand.hbm [shape: s32[5], index: 0, kind: input, shape index: {}]
  %s1 = inlined_call_operand.hbm [shape: f32[32,256], index: 1, kind: input, shape index: {}]
  %s2 = inlined_call_operand.hbm [shape: f32[5,256], index: 2, kind: input, shape index: {}]
  %s3 = inlined_call_operand.vmem [shape: s32[1,5], index: 3, kind: input, shape index: {}]
  %s4 = inlined_call_operand.hbm [shape: f32[1,1], index: 4, kind: output, shape index: {}]
  %s5 = sld [smem:[#allocation0]]
  $region61: #{tpu_custom_call.1} parent=0
    _
  %s7 = ssub.s32 1, %s5
  %s8 = scalar_select 0, %s7, %s5
  %10 = dma.hbm_to_smem %s0, 16, [#allocation7], [#allocation6]
  %11 = dma.done [#allocation6], 16
  %12 = sfence
  $region1: #{tpu_custom_call.1} parent=0
    #allocation8 [shape = 'u8[32768]{0}', space=vmem, size = 0x8000, scoped, tag = 'input window, operand 1']
    #allocation9 [shape = 's32[2]{0}', space=sflag, size = 0x8, scoped, tag = 'scoped memory for tpu_custom_call.1']
    #allocation10 [shape = 's32[2]{0}', space=sflag, size = 0x8, scoped, tag = 'scoped memory for tpu_custom_call.1']
    #allocation11 [shape = 'u8[8192]{0}', space=vmem, size = 0x2000, scoped, tag = 'input window, operand 2, single buffered']
    #allocation12 [shape = 's32[1]{0}', space=sflag, size = 0x4, scoped, tag = 'scoped memory for tpu_custom_call.1']
    #allocation13 [shape = 'u8[512]{0}', space=vmem, size = 0x400, scoped, tag = 'output window, operand 0, single buffered']
    %13 = vsyncpa [#allocation9], 0
    %s14 = scalar_lea.sflag [#allocation9], 1
    %15 = vsyncpa %s14, 0
    %16 = vsyncpa [#allocation12], 0
    %17 = vsyncpa [#allocation10], 0
    loop: start=0, step=1, limit=4
    $region2: #{tpu_custom_call.1} parent=1 // loop_pre_header
      _
    $region3: #{tpu_custom_call.1} parent=1 // loop_header
      %s19 = sphi 0, %s23
      %p20 = scmp.ge.s32.totalorder %s19, 4
      %s29 = sphi 0, %s31
      %s32 = sphi 0, %s29
      %s33 = sphi 0, %s32
      %s49 = sphi 0, %s33
      %s53 = sphi 0, %s53
      %s55 = sphi 0, %s53
      %s56 = sphi 0, %s55
      %s70 = sphi 0, %s56
      %s74 = sphi 0, %s74
      %s76 = sphi 0, %s74
      %s77 = sphi 0, %s76
      %s91 = sphi 0, %s77
      %s95 = sphi 0, %s95
      %s97 = sphi 0, %s95
      %s98 = sphi 0, %s97
      %s112 = sphi 0, %s98
    $region4: #{tpu_custom_call.1} parent=1 // loop_header_branch
      %22 = sbr.rel (%p20) target = $region8
    $region5: #{tpu_custom_call.1} parent=1 // loop_body
      %s24 = ssub.s32 %s19, 1
      %s25 = ssub.s32 %s19, 2
      %s26 = sadd.s32 %s19, 1
      %s27 = ssub.s32 %s19, %s26
      %p28 = scmp.eq.s32.totalorder %s27, 0
      %s30 = sadd.s32 %s29, 1
      %s31 = scalar_select %p28, %s29, %s30
      %p34 = pneg %p28
      %p35 = scmp.eq.s32.totalorder %s19, 1
      %p36 = por %p34, %p35
      %p37 = scmp.ne.s32.totalorder %s29, %s32
      %p38 = scmp.eq.s32.totalorder %s19, 0
      %p39 = por %p37, %p38
      %p40 = scmp.ne.s32.totalorder %s29, %s32
      %p41 = scmp.eq.s32.totalorder %s24, 1
      %p42 = por %p40, %p41
      %p43 = scmp.ne.s32.totalorder %s32, %s33
      %p44 = scmp.eq.s32.totalorder %s24, 0
      %p45 = por %p43, %p44
      %p46 = scmp.ne.s32.totalorder %s32, %s33
      %p47 = scmp.eq.s32.totalorder %s25, 1
      %p48 = por %p46, %p47
      %p50 = scmp.ne.s32.totalorder %s33, %s49
      %p51 = scmp.eq.s32.totalorder %s25, 0
      %p52 = por %p50, %p51
      %s54 = sadd.s32 %s53, 1
      %p57 = scmp.eq.s32.totalorder %s19, 1
      %p58 = scmp.ne.s32.totalorder %s53, %s55
      %p59 = scmp.eq.s32.totalorder %s19, 0
      %p60 = por %p58, %p59
      %p61 = scmp.ne.s32.totalorder %s53, %s55
      %p62 = scmp.eq.s32.totalorder %s24, 1
      %p63 = por %p61, %p62
      %p64 = scmp.ne.s32.totalorder %s55, %s56
      %p65 = scmp.eq.s32.totalorder %s24, 0
      %p66 = por %p64, %p65
      %p67 = scmp.ne.s32.totalorder %s55, %s56
      %p68 = scmp.eq.s32.totalorder %s25, 1
      %p69 = por %p67, %p68
      %p71 = scmp.ne.s32.totalorder %s56, %s70
      %p72 = scmp.eq.s32.totalorder %s25, 0
      %p73 = por %p71, %p72
      %s75 = sadd.s32 %s74, 1
      %p78 = scmp.eq.s32.totalorder %s19, 1
      %p79 = scmp.ne.s32.totalorder %s74, %s76
      %p80 = scmp.eq.s32.totalorder %s19, 0
      %p81 = por %p79, %p80
      %p82 = scmp.ne.s32.totalorder %s74, %s76
      %p83 = scmp.eq.s32.totalorder %s24, 1
      %p84 = por %p82, %p83
      %p85 = scmp.ne.s32.totalorder %s76, %s77
      %p86 = scmp.eq.s32.totalorder %s24, 0
      %p87 = por %p85, %p86
      %p88 = scmp.ne.s32.totalorder %s76, %s77
      %p89 = scmp.eq.s32.totalorder %s25, 1
      %p90 = por %p88, %p89
      %p92 = scmp.ne.s32.totalorder %s77, %s91
      %p93 = scmp.eq.s32.totalorder %s25, 0
      %p94 = por %p92, %p93
      %s96 = sadd.s32 %s95, 1
      %p99 = scmp.eq.s32.totalorder %s19, 1
      %p100 = scmp.ne.s32.totalorder %s95, %s97
      %p101 = scmp.eq.s32.totalorder %s19, 0
      %p102 = por %p100, %p101
      %p103 = scmp.ne.s32.totalorder %s95, %s97
      %p104 = scmp.eq.s32.totalorder %s24, 1
      %p105 = por %p103, %p104
      %p106 = scmp.ne.s32.totalorder %s97, %s98
      %p107 = scmp.eq.s32.totalorder %s24, 0
      %p108 = por %p106, %p107
      %p109 = scmp.ne.s32.totalorder %s97, %s98
      %p110 = scmp.eq.s32.totalorder %s25, 1
      %p111 = por %p109, %p110
      %p113 = scmp.ne.s32.totalorder %s98, %s112
      %p114 = scmp.eq.s32.totalorder %s25, 0
      %p115 = por %p113, %p114
      %p116 = scmp.le.s32.totalorder 1, %s19
      %p117 = scmp.lt.s32.totalorder %s19, 3
      %p118 = pnand %p116, %p117
      %p119 = pneg %p118
      // Predicated region
      $region9: #{tpu_custom_call.1} parent=5 // pred_check
        _
      $region10: #{tpu_custom_call.1} parent=5 // pred_check_branch
        %121 = sbr.rel (%p118) target = $region12
      $region11: #{tpu_custom_call.1} parent=5 // pred_region
        %s122 = ssub.s32 %s19, 1
        // Predicated region
        $region13: #{tpu_custom_call.1} parent=11 // pred_check
          %p123 = pneg %p66
        $region14: #{tpu_custom_call.1} parent=11 // pred_check_branch
          %125 = sbr.rel (%p123) target = $region16
        $region15: #{tpu_custom_call.1} parent=11 // pred_region
          %s127 = ssub.s32 256, 256
          %128 = vsyncadd [#allocation12], %s127
          %s130 = sshll.u32 [#allocation11], 4
          %s131 = int_to_ptr.vmem [resolvable:$true] %s130
          %133 = dma.hbm_to_vmem [thread:$0]  %s2, 256, %s131, [#allocation12]
        $region16: #{tpu_custom_call.1} parent=11 // pred_fallthru
          _
        // Predicated region
        $region17: #{tpu_custom_call.1} parent=11 // pred_check
          %p134 = pneg %p87
        $region18: #{tpu_custom_call.1} parent=11 // pred_check_branch
          %136 = sbr.rel (%p134) target = $region20
        $region19: #{tpu_custom_call.1} parent=11 // pred_region
          _
        $region20: #{tpu_custom_call.1} parent=11 // pred_fallthru
          _
      $region12: #{tpu_custom_call.1} parent=5 // pred_fallthru
        _
      %p137 = scmp.lt.s32.totalorder %s19, 2
      // Predicated region
      $region21: #{tpu_custom_call.1} parent=5 // pred_check
        %p138 = pneg %p137
      $region22: #{tpu_custom_call.1} parent=5 // pred_check_branch
        %140 = sbr.rel (%p138) target = $region24
      $region23: #{tpu_custom_call.1} parent=5 // pred_region
        // Predicated region
        $region25: #{tpu_custom_call.1} parent=23 // pred_check
          %p141 = pneg %p39
        $region26: #{tpu_custom_call.1} parent=23 // pred_check_branch
          %143 = sbr.rel (%p141) target = $region28
        $region27: #{tpu_custom_call.1} parent=23 // pred_region
          %s144 = sand.u32 %s29, 1
          %s145 = scalar_lea.sflag [#allocation9], %s144
          %s146 = sand.u32 %s29, 1
          %s147 = smul.addr %s146, 32
          %s148 = scalar_lea.vmem [#allocation8], %s147
          %s149 = smul.u32 2, %s19
          %s151 = ssub.s32 512, 512
          %152 = vsyncadd %s145, %s151
          %s153 = smul.addr %s149, 2
          %s154 = smul.addr %s153, 128
          %s155 = scalar_lea.hbm %s1, %s154
          %s156 = sshll.u32 %s148, 4
          %s157 = int_to_ptr.vmem [resolvable:$true] %s156
          %162 = dma.hbm_to_vmem [thread:$0]  %s155, 512, %s157, %s145, 256, 256, 16
        $region28: #{tpu_custom_call.1} parent=23 // pred_fallthru
          _
      $region24: #{tpu_custom_call.1} parent=5 // pred_fallthru
        _
      %p163 = scmp.le.s32.totalorder 1, %s19
      %p164 = scmp.lt.s32.totalorder %s19, 3
      %p165 = pnand %p163, %p164
      %p166 = pneg %p165
      // Predicated region
      $region29: #{tpu_custom_call.1} parent=5 // pred_check
        _
      $region30: #{tpu_custom_call.1} parent=5 // pred_check_branch
        %168 = sbr.rel (%p165) target = $region32
      $region31: #{tpu_custom_call.1} parent=5 // pred_region
        %s169 = ssub.s32 %s19, 1
        %s170 = sand.u32 %s32, 1
        %s171 = scalar_lea.sflag [#allocation9], %s170
        %s172 = sand.u32 %s32, 1
        %s173 = smul.addr %s172, 32
        %s174 = scalar_lea.vmem [#allocation8], %s173
        // Predicated region
        $region33: #{tpu_custom_call.1} parent=31 // pred_check
          %p175 = pneg %p45
        $region34: #{tpu_custom_call.1} parent=31 // pred_check_branch
          %177 = sbr.rel (%p175) target = $region36
        $region35: #{tpu_custom_call.1} parent=31 // pred_region
          %178 = dma.done %s171, 512
        $region36: #{tpu_custom_call.1} parent=31 // pred_fallthru
          _
        // Predicated region
        $region37: #{tpu_custom_call.1} parent=31 // pred_check
          %p179 = pneg %p66
        $region38: #{tpu_custom_call.1} parent=31 // pred_check_branch
          %181 = sbr.rel (%p179) target = $region40
        $region39: #{tpu_custom_call.1} parent=31 // pred_region
          %182 = dma.done [#allocation12], 256
        $region40: #{tpu_custom_call.1} parent=31 // pred_fallthru
          _
        %s183 = sand.u32 %s32, 1
        %s184 = scalar_lea.sflag [#allocation9], %s183
        %s185 = sand.u32 %s32, 1
        %s186 = smul.addr %s185, 32
        %s187 = scalar_lea.vmem [#allocation8], %s186
        %p188 = pneg %p45
        %p189 = pneg %p42
        %p190 = pneg %p66
        %p191 = pneg %p63
        %p192 = pneg %p87
        %p193 = pneg %p84
        %p194 = pneg %p108
        %p195 = pneg %p105
        %s196 = smul.u32 2, %s24
        %s197 = smul.u32 %s24, 16
        %p198 = scmp.eq.s32.totalorder %s24, 0
        // Predicated region
        $region41: #{tpu_custom_call.1} parent=31 // pred_check
          %p199 = pneg %p198
        $region42: #{tpu_custom_call.1} parent=31 // pred_check_branch
          %201 = sbr.rel (%p199) target = $region44
        $region43: #{tpu_custom_call.1} parent=31 // pred_region
          %vm202 = vcmask 32768
          %203 = vst.msk [vmem:[#allocation2] sm:$0x1] %vm202, 1e+30
          %204 = vst.msk [vmem:[#allocation3] sm:$0x1] %vm202, 1e+30
          %205 = vst.msk [vmem:[#allocation4] sm:$0x1] %vm202, 1e+30
          %206 = vst.msk [vmem:[#allocation5] sm:$0x1] %vm202, 0.0
        $region44: #{tpu_custom_call.1} parent=31 // pred_fallthru
          _
        %v207 = vld [vmem:[%s174] sm:$0xff]
        %v208 = vld [vmem:[%s174 + $0x8] sm:$0xff]
        %v209 = vld [vmem:[%s174 + $0x10] sm:$0xff]
        %v210 = vld [vmem:[%s174 + $0x18] sm:$0xff]
        %v211 = vld [vmem:[%s3] sm:$0x1]
        %v212 = vlaneseq
        %v213 = vshrl.u32 %v212, 7
        %v214 = vadd.s32 %v213, 8
        %v215 = vstv %s197
        %v216 = vadd.s32 %v213, %v215
        %v217 = vadd.s32 %v214, %v215
        %vm218 = vcmp.lt.s32.totalorder %v216, 21
        %vm219 = vcmp.lt.s32.totalorder %v217, 21
        %v220 = vlaneseq
        %v221 = vand.u32 %v220, 127
        %v222 = vlaneseq
        %v223 = vshrl.u32 %v222, 7
        %v224 = vsub.s32 0, %v223
        %v225 = vrot.slane %v211, %v224
        %vm226 = vcmp.eq.s32.totalorder %v216, %v225
        %vm227 = vcmp.eq.s32.totalorder %v217, %v225
        %vm228 = vcmp.ge.s32.totalorder %v211, %v215
        %s229 = sadd.s32 %s197, 16
        %v230 = vstv %s229
        %vm231 = vcmp.lt.s32.totalorder %v211, %v230
        %vm232 = vmand %vm228, %vm231
        %v233 = vld [vmem:[#allocation11] ss:$8 sm:$0x3]
        %v235 = vlaneseq
        %v236 = vshrl.u32 %v235, 7
        %v237 = vsub.s32 0, %v236
        %v238 = vrot.slane %v233, %v237
        %v239 = vlaneseq
        %v240 = vshrl.u32 %v239, 7
        %v241 = vsub.s32 1, %v240
        %v242 = vrot.slane %v233, %v241
        %v245 = vsub.f32 %v207, %v238
        %v246 = vsub.f32 %v208, %v242
        %v247 = vsub.f32 %v209, %v238
        %v248 = vsub.f32 %v210, %v242
        %v249 = vand.u32 2147483647, %v245
        %v250 = vand.u32 2147483647, %v246
        %v251 = vand.u32 2147483647, %v247
        %v252 = vand.u32 2147483647, %v248
        %v253 = vadd.f32 %v249, %v250
        %254 = vadd.xlane.f32.xlu0 %v253
        %v255 = vpop.xlane.xlu0 %254
        %v256 = vadd.f32 %v251, %v252
        %257 = vadd.xlane.f32.xlu0 %v256
        %v258 = vpop.xlane.xlu0 %257
        %vm259 = vcmp.eq.s32.totalorder %v221, 0
        %s260 = sld [smem:[#allocation7]]
        %v261 = vsel %vm218, %v255, 1e+30
        %v262 = vsel %vm219, %v258, 1e+30
        %v263 = vmin.f32 %v261, %v262
        %v264 = vrot.slane %v263, 4
        %v265 = vmin.f32 %v263, %v264
        %v266 = vrot.slane %v265, 2
        %v267 = vmin.f32 %v265, %v266
        %v268 = vrot.slane %v267, 1
        %v269 = vmin.f32 %v267, %v268
        %v270 = vld [vmem:[#allocation2] sm:$0x1]
        %v271 = vmin.f32 %v270, %v269
        %v272 = vsel %vm259, %v271, %v270
        %vm273 = vcmask 32768
        %274 = vst.msk [vmem:[#allocation2] sm:$0x1] %vm273, %v272
        %v275 = vstv %s260
        %vm276 = vcmp.ne.s32.totalorder %v216, %v275
        %vm277 = vcmp.ne.s32.totalorder %v217, %v275
        %vm278 = vmand %vm218, %vm276
        %vm279 = vmand %vm219, %vm277
        %v280 = vsel %vm278, %v255, 1e+30
        %v281 = vsel %vm279, %v258, 1e+30
        %v282 = vmin.f32 %v280, %v281
        %v283 = vrot.slane %v282, 4
        %v284 = vmin.f32 %v282, %v283
        %v285 = vrot.slane %v284, 2
        %v286 = vmin.f32 %v284, %v285
        %v287 = vrot.slane %v286, 1
        %v288 = vmin.f32 %v286, %v287
        %v289 = vld [vmem:[#allocation3] sm:$0x1]
        %v290 = vmin.f32 %v289, %v288
        %v291 = vsel %vm259, %v290, %v289
        %292 = vst.msk [vmem:[#allocation3] sm:$0x1] %vm273, %v291
        %v293 = vsel %vm226, %v255, 0.0
        %v294 = vsel %vm227, %v258, 0.0
        %vm295 = vcmask 39936
        %v296 = vsel %vm295, %v293, 0.0
        %v297 = vsel %vm295, %v294, 0.0
        %v298 = vadd.f32 %v296, %v297
        %v299 = vrot.slane %v298, 4
        %v300 = vadd.f32 %v298, %v299
        %v301 = vrot.slane %v300, 2
        %v302 = vadd.f32 %v300, %v301
        %v303 = vrot.slane %v302, 1
        %v304 = vadd.f32 %v302, %v303
        %vm305 = vcmp.ne.s32.totalorder %v221, 0
        %vm306 = vmand %vm232, %vm305
        %v307 = vsel %vm306, %v304, 1e+30
        %v308 = vld [vmem:[#allocation4] sm:$0x1]
        %v309 = vmin.f32 %v308, %v307
        %310 = vst.msk [vmem:[#allocation4] sm:$0x1] %vm273, %v309
        %s311 = scvt.s32.f32 %s260
        %v312 = vstv %s311
        %v313 = vsub.f32 %v233, %v312
        %v314 = vand.u32 2147483647, %v313
        %v316 = vlaneseq
        %v317 = vshrl.u32 %v316, 7
        %v318 = vsub.s32 0, %v317
        %v319 = vrot.slane %v314, %v318
        %v320 = vlaneseq
        %v321 = vshrl.u32 %v320, 7
        %v322 = vsub.s32 1, %v321
        %v323 = vrot.slane %v314, %v322
        %vm326 = vcmask 1040384
        %v327 = vsel %vm326, %v319, 0.0
        %v328 = vsel %vm326, %v323, 0.0
        %v329 = vadd.f32 %v327, %v328
        %330 = vadd.xlane.f32.xlu0 %v329
        %v331 = vpop.xlane.xlu0 %330
        %v332 = vld [vmem:[#allocation5] sm:$0x1]
        %v333 = vsel %vm259, %v331, %v332
        %334 = vst.msk [vmem:[#allocation5] sm:$0x1] %vm273, %v333
        %s335 = scalar_lea.vmem [#allocation11], 1
        %v336 = vld [vmem:[%s335] ss:$8 sm:$0x3]
        %v338 = vlaneseq
        %v339 = vshrl.u32 %v338, 7
        %v340 = vsub.s32 0, %v339
        %v341 = vrot.slane %v336, %v340
        %v342 = vlaneseq
        %v343 = vshrl.u32 %v342, 7
        %v344 = vsub.s32 1, %v343
        %v345 = vrot.slane %v336, %v344
        %v348 = vsub.f32 %v207, %v341
        %v349 = vsub.f32 %v208, %v345
        %v350 = vsub.f32 %v209, %v341
        %v351 = vsub.f32 %v210, %v345
        %v352 = vand.u32 2147483647, %v348
        %v353 = vand.u32 2147483647, %v349
        %v354 = vand.u32 2147483647, %v350
        %v355 = vand.u32 2147483647, %v351
        %v356 = vadd.f32 %v352, %v353
        %357 = vadd.xlane.f32.xlu0 %v356
        %v358 = vpop.xlane.xlu0 %357
        %v359 = vadd.f32 %v354, %v355
        %360 = vadd.xlane.f32.xlu0 %v359
        %v361 = vpop.xlane.xlu0 %360
        %vm362 = vcmp.eq.s32.totalorder %v221, 1
        %s363 = sld [smem:[#allocation7 + $0x1]]
        %v364 = vsel %vm218, %v358, 1e+30
        %v365 = vsel %vm219, %v361, 1e+30
        %v366 = vmin.f32 %v364, %v365
        %v367 = vrot.slane %v366, 4
        %v368 = vmin.f32 %v366, %v367
        %v369 = vrot.slane %v368, 2
        %v370 = vmin.f32 %v368, %v369
        %v371 = vrot.slane %v370, 1
        %v372 = vmin.f32 %v370, %v371
        %v373 = vld [vmem:[#allocation2] sm:$0x1]
        %v374 = vmin.f32 %v373, %v372
        %v375 = vsel %vm362, %v374, %v373
        %376 = vst.msk [vmem:[#allocation2] sm:$0x1] %vm273, %v375
        %v377 = vstv %s363
        %vm378 = vcmp.ne.s32.totalorder %v216, %v377
        %vm379 = vcmp.ne.s32.totalorder %v217, %v377
        %vm380 = vmand %vm218, %vm378
        %vm381 = vmand %vm219, %vm379
        %v382 = vsel %vm380, %v358, 1e+30
        %v383 = vsel %vm381, %v361, 1e+30
        %v384 = vmin.f32 %v382, %v383
        %v385 = vrot.slane %v384, 4
        %v386 = vmin.f32 %v384, %v385
        %v387 = vrot.slane %v386, 2
        %v388 = vmin.f32 %v386, %v387
        %v389 = vrot.slane %v388, 1
        %v390 = vmin.f32 %v388, %v389
        %v391 = vld [vmem:[#allocation3] sm:$0x1]
        %v392 = vmin.f32 %v391, %v390
        %v393 = vsel %vm362, %v392, %v391
        %394 = vst.msk [vmem:[#allocation3] sm:$0x1] %vm273, %v393
        %v395 = vsel %vm226, %v358, 0.0
        %v396 = vsel %vm227, %v361, 0.0
        %v397 = vsel %vm295, %v395, 0.0
        %v398 = vsel %vm295, %v396, 0.0
        %v399 = vadd.f32 %v397, %v398
        %v400 = vrot.slane %v399, 4
        %v401 = vadd.f32 %v399, %v400
        %v402 = vrot.slane %v401, 2
        %v403 = vadd.f32 %v401, %v402
        %v404 = vrot.slane %v403, 1
        %v405 = vadd.f32 %v403, %v404
        %vm406 = vcmp.ne.s32.totalorder %v221, 1
        %vm407 = vmand %vm232, %vm406
        %v408 = vsel %vm407, %v405, 1e+30
        %v409 = vld [vmem:[#allocation4] sm:$0x1]
        %v410 = vmin.f32 %v409, %v408
        %411 = vst.msk [vmem:[#allocation4] sm:$0x1] %vm273, %v410
        %s412 = scvt.s32.f32 %s363
        %v413 = vstv %s412
        %v414 = vsub.f32 %v336, %v413
        %v415 = vand.u32 2147483647, %v414
        %v417 = vlaneseq
        %v418 = vshrl.u32 %v417, 7
        %v419 = vsub.s32 0, %v418
        %v420 = vrot.slane %v415, %v419
        %v421 = vlaneseq
        %v422 = vshrl.u32 %v421, 7
        %v423 = vsub.s32 1, %v422
        %v424 = vrot.slane %v415, %v423
        %v427 = vsel %vm326, %v420, 0.0
        %v428 = vsel %vm326, %v424, 0.0
        %v429 = vadd.f32 %v427, %v428
        %430 = vadd.xlane.f32.xlu0 %v429
        %v431 = vpop.xlane.xlu0 %430
        %v432 = vld [vmem:[#allocation5] sm:$0x1]
        %v433 = vsel %vm362, %v431, %v432
        %434 = vst.msk [vmem:[#allocation5] sm:$0x1] %vm273, %v433
        %s435 = scalar_lea.vmem [#allocation11], 2
        %v436 = vld [vmem:[%s435] ss:$8 sm:$0x3]
        %v438 = vlaneseq
        %v439 = vshrl.u32 %v438, 7
        %v440 = vsub.s32 0, %v439
        %v441 = vrot.slane %v436, %v440
        %v442 = vlaneseq
        %v443 = vshrl.u32 %v442, 7
        %v444 = vsub.s32 1, %v443
        %v445 = vrot.slane %v436, %v444
        %v448 = vsub.f32 %v207, %v441
        %v449 = vsub.f32 %v208, %v445
        %v450 = vsub.f32 %v209, %v441
        %v451 = vsub.f32 %v210, %v445
        %v452 = vand.u32 2147483647, %v448
        %v453 = vand.u32 2147483647, %v449
        %v454 = vand.u32 2147483647, %v450
        %v455 = vand.u32 2147483647, %v451
        %v456 = vadd.f32 %v452, %v453
        %457 = vadd.xlane.f32.xlu0 %v456
        %v458 = vpop.xlane.xlu0 %457
        %v459 = vadd.f32 %v454, %v455
        %460 = vadd.xlane.f32.xlu0 %v459
        %v461 = vpop.xlane.xlu0 %460
        %vm462 = vcmp.eq.s32.totalorder %v221, 2
        %s463 = sld [smem:[#allocation7 + $0x2]]
        %v464 = vsel %vm218, %v458, 1e+30
        %v465 = vsel %vm219, %v461, 1e+30
        %v466 = vmin.f32 %v464, %v465
        %v467 = vrot.slane %v466, 4
        %v468 = vmin.f32 %v466, %v467
        %v469 = vrot.slane %v468, 2
        %v470 = vmin.f32 %v468, %v469
        %v471 = vrot.slane %v470, 1
        %v472 = vmin.f32 %v470, %v471
        %v473 = vld [vmem:[#allocation2] sm:$0x1]
        %v474 = vmin.f32 %v473, %v472
        %v475 = vsel %vm462, %v474, %v473
        %476 = vst.msk [vmem:[#allocation2] sm:$0x1] %vm273, %v475
        %v477 = vstv %s463
        %vm478 = vcmp.ne.s32.totalorder %v216, %v477
        %vm479 = vcmp.ne.s32.totalorder %v217, %v477
        %vm480 = vmand %vm218, %vm478
        %vm481 = vmand %vm219, %vm479
        %v482 = vsel %vm480, %v458, 1e+30
        %v483 = vsel %vm481, %v461, 1e+30
        %v484 = vmin.f32 %v482, %v483
        %v485 = vrot.slane %v484, 4
        %v486 = vmin.f32 %v484, %v485
        %v487 = vrot.slane %v486, 2
        %v488 = vmin.f32 %v486, %v487
        %v489 = vrot.slane %v488, 1
        %v490 = vmin.f32 %v488, %v489
        %v491 = vld [vmem:[#allocation3] sm:$0x1]
        %v492 = vmin.f32 %v491, %v490
        %v493 = vsel %vm462, %v492, %v491
        %494 = vst.msk [vmem:[#allocation3] sm:$0x1] %vm273, %v493
        %v495 = vsel %vm226, %v458, 0.0
        %v496 = vsel %vm227, %v461, 0.0
        %v497 = vsel %vm295, %v495, 0.0
        %v498 = vsel %vm295, %v496, 0.0
        %v499 = vadd.f32 %v497, %v498
        %v500 = vrot.slane %v499, 4
        %v501 = vadd.f32 %v499, %v500
        %v502 = vrot.slane %v501, 2
        %v503 = vadd.f32 %v501, %v502
        %v504 = vrot.slane %v503, 1
        %v505 = vadd.f32 %v503, %v504
        %vm506 = vcmp.ne.s32.totalorder %v221, 2
        %vm507 = vmand %vm232, %vm506
        %v508 = vsel %vm507, %v505, 1e+30
        %v509 = vld [vmem:[#allocation4] sm:$0x1]
        %v510 = vmin.f32 %v509, %v508
        %511 = vst.msk [vmem:[#allocation4] sm:$0x1] %vm273, %v510
        %s512 = scvt.s32.f32 %s463
        %v513 = vstv %s512
        %v514 = vsub.f32 %v436, %v513
        %v515 = vand.u32 2147483647, %v514
        %v517 = vlaneseq
        %v518 = vshrl.u32 %v517, 7
        %v519 = vsub.s32 0, %v518
        %v520 = vrot.slane %v515, %v519
        %v521 = vlaneseq
        %v522 = vshrl.u32 %v521, 7
        %v523 = vsub.s32 1, %v522
        %v524 = vrot.slane %v515, %v523
        %v527 = vsel %vm326, %v520, 0.0
        %v528 = vsel %vm326, %v524, 0.0
        %v529 = vadd.f32 %v527, %v528
        %530 = vadd.xlane.f32.xlu0 %v529
        %v531 = vpop.xlane.xlu0 %530
        %v532 = vld [vmem:[#allocation5] sm:$0x1]
        %v533 = vsel %vm462, %v531, %v532
        %534 = vst.msk [vmem:[#allocation5] sm:$0x1] %vm273, %v533
        %s535 = scalar_lea.vmem [#allocation11], 3
        %v536 = vld [vmem:[%s535] ss:$8 sm:$0x3]
        %v538 = vlaneseq
        %v539 = vshrl.u32 %v538, 7
        %v540 = vsub.s32 0, %v539
        %v541 = vrot.slane %v536, %v540
        %v542 = vlaneseq
        %v543 = vshrl.u32 %v542, 7
        %v544 = vsub.s32 1, %v543
        %v545 = vrot.slane %v536, %v544
        %v548 = vsub.f32 %v207, %v541
        %v549 = vsub.f32 %v208, %v545
        %v550 = vsub.f32 %v209, %v541
        %v551 = vsub.f32 %v210, %v545
        %v552 = vand.u32 2147483647, %v548
        %v553 = vand.u32 2147483647, %v549
        %v554 = vand.u32 2147483647, %v550
        %v555 = vand.u32 2147483647, %v551
        %v556 = vadd.f32 %v552, %v553
        %557 = vadd.xlane.f32.xlu0 %v556
        %v558 = vpop.xlane.xlu0 %557
        %v559 = vadd.f32 %v554, %v555
        %560 = vadd.xlane.f32.xlu0 %v559
        %v561 = vpop.xlane.xlu0 %560
        %vm562 = vcmp.eq.s32.totalorder %v221, 3
        %s563 = sld [smem:[#allocation7 + $0x3]]
        %v564 = vsel %vm218, %v558, 1e+30
        %v565 = vsel %vm219, %v561, 1e+30
        %v566 = vmin.f32 %v564, %v565
        %v567 = vrot.slane %v566, 4
        %v568 = vmin.f32 %v566, %v567
        %v569 = vrot.slane %v568, 2
        %v570 = vmin.f32 %v568, %v569
        %v571 = vrot.slane %v570, 1
        %v572 = vmin.f32 %v570, %v571
        %v573 = vld [vmem:[#allocation2] sm:$0x1]
        %v574 = vmin.f32 %v573, %v572
        %v575 = vsel %vm562, %v574, %v573
        %576 = vst.msk [vmem:[#allocation2] sm:$0x1] %vm273, %v575
        %v577 = vstv %s563
        %vm578 = vcmp.ne.s32.totalorder %v216, %v577
        %vm579 = vcmp.ne.s32.totalorder %v217, %v577
        %vm580 = vmand %vm218, %vm578
        %vm581 = vmand %vm219, %vm579
        %v582 = vsel %vm580, %v558, 1e+30
        %v583 = vsel %vm581, %v561, 1e+30
        %v584 = vmin.f32 %v582, %v583
        %v585 = vrot.slane %v584, 4
        %v586 = vmin.f32 %v584, %v585
        %v587 = vrot.slane %v586, 2
        %v588 = vmin.f32 %v586, %v587
        %v589 = vrot.slane %v588, 1
        %v590 = vmin.f32 %v588, %v589
        %v591 = vld [vmem:[#allocation3] sm:$0x1]
        %v592 = vmin.f32 %v591, %v590
        %v593 = vsel %vm562, %v592, %v591
        %594 = vst.msk [vmem:[#allocation3] sm:$0x1] %vm273, %v593
        %v595 = vsel %vm226, %v558, 0.0
        %v596 = vsel %vm227, %v561, 0.0
        %v597 = vsel %vm295, %v595, 0.0
        %v598 = vsel %vm295, %v596, 0.0
        %v599 = vadd.f32 %v597, %v598
        %v600 = vrot.slane %v599, 4
        %v601 = vadd.f32 %v599, %v600
        %v602 = vrot.slane %v601, 2
        %v603 = vadd.f32 %v601, %v602
        %v604 = vrot.slane %v603, 1
        %v605 = vadd.f32 %v603, %v604
        %vm606 = vcmp.ne.s32.totalorder %v221, 3
        %vm607 = vmand %vm232, %vm606
        %v608 = vsel %vm607, %v605, 1e+30
        %v609 = vld [vmem:[#allocation4] sm:$0x1]
        %v610 = vmin.f32 %v609, %v608
        %611 = vst.msk [vmem:[#allocation4] sm:$0x1] %vm273, %v610
        %s612 = scvt.s32.f32 %s563
        %v613 = vstv %s612
        %v614 = vsub.f32 %v536, %v613
        %v615 = vand.u32 2147483647, %v614
        %v617 = vlaneseq
        %v618 = vshrl.u32 %v617, 7
        %v619 = vsub.s32 0, %v618
        %v620 = vrot.slane %v615, %v619
        %v621 = vlaneseq
        %v622 = vshrl.u32 %v621, 7
        %v623 = vsub.s32 1, %v622
        %v624 = vrot.slane %v615, %v623
        %v627 = vsel %vm326, %v620, 0.0
        %v628 = vsel %vm326, %v624, 0.0
        %v629 = vadd.f32 %v627, %v628
        %630 = vadd.xlane.f32.xlu0 %v629
        %v631 = vpop.xlane.xlu0 %630
        %v632 = vld [vmem:[#allocation5] sm:$0x1]
        %v633 = vsel %vm562, %v631, %v632
        %634 = vst.msk [vmem:[#allocation5] sm:$0x1] %vm273, %v633
        %s635 = scalar_lea.vmem [#allocation11], 4
        %v636 = vld [vmem:[%s635] ss:$8 sm:$0x3]
        %v638 = vlaneseq
        %v639 = vshrl.u32 %v638, 7
        %v640 = vsub.s32 0, %v639
        %v641 = vrot.slane %v636, %v640
        %v642 = vlaneseq
        %v643 = vshrl.u32 %v642, 7
        %v644 = vsub.s32 1, %v643
        %v645 = vrot.slane %v636, %v644
        %v648 = vsub.f32 %v207, %v641
        %v649 = vsub.f32 %v208, %v645
        %v650 = vsub.f32 %v209, %v641
        %v651 = vsub.f32 %v210, %v645
        %v652 = vand.u32 2147483647, %v648
        %v653 = vand.u32 2147483647, %v649
        %v654 = vand.u32 2147483647, %v650
        %v655 = vand.u32 2147483647, %v651
        %v656 = vadd.f32 %v652, %v653
        %657 = vadd.xlane.f32.xlu0 %v656
        %v658 = vpop.xlane.xlu0 %657
        %v659 = vadd.f32 %v654, %v655
        %660 = vadd.xlane.f32.xlu0 %v659
        %v661 = vpop.xlane.xlu0 %660
        %vm662 = vcmp.eq.s32.totalorder %v221, 4
        %s663 = sld [smem:[#allocation7 + $0x4]]
        %v664 = vsel %vm218, %v658, 1e+30
        %v665 = vsel %vm219, %v661, 1e+30
        %v666 = vmin.f32 %v664, %v665
        %v667 = vrot.slane %v666, 4
        %v668 = vmin.f32 %v666, %v667
        %v669 = vrot.slane %v668, 2
        %v670 = vmin.f32 %v668, %v669
        %v671 = vrot.slane %v670, 1
        %v672 = vmin.f32 %v670, %v671
        %v673 = vld [vmem:[#allocation2] sm:$0x1]
        %v674 = vmin.f32 %v673, %v672
        %v675 = vsel %vm662, %v674, %v673
        %676 = vst.msk [vmem:[#allocation2] sm:$0x1] %vm273, %v675
        %v677 = vstv %s663
        %vm678 = vcmp.ne.s32.totalorder %v216, %v677
        %vm679 = vcmp.ne.s32.totalorder %v217, %v677
        %vm680 = vmand %vm218, %vm678
        %vm681 = vmand %vm219, %vm679
        %v682 = vsel %vm680, %v658, 1e+30
        %v683 = vsel %vm681, %v661, 1e+30
        %v684 = vmin.f32 %v682, %v683
        %v685 = vrot.slane %v684, 4
        %v686 = vmin.f32 %v684, %v685
        %v687 = vrot.slane %v686, 2
        %v688 = vmin.f32 %v686, %v687
        %v689 = vrot.slane %v688, 1
        %v690 = vmin.f32 %v688, %v689
        %v691 = vld [vmem:[#allocation3] sm:$0x1]
        %v692 = vmin.f32 %v691, %v690
        %v693 = vsel %vm662, %v692, %v691
        %694 = vst.msk [vmem:[#allocation3] sm:$0x1] %vm273, %v693
        %v695 = vsel %vm226, %v658, 0.0
        %v696 = vsel %vm227, %v661, 0.0
        %v697 = vsel %vm295, %v695, 0.0
        %v698 = vsel %vm295, %v696, 0.0
        %v699 = vadd.f32 %v697, %v698
        %v700 = vrot.slane %v699, 4
        %v701 = vadd.f32 %v699, %v700
        %v702 = vrot.slane %v701, 2
        %v703 = vadd.f32 %v701, %v702
        %v704 = vrot.slane %v703, 1
        %v705 = vadd.f32 %v703, %v704
        %vm706 = vcmp.ne.s32.totalorder %v221, 4
        %vm707 = vmand %vm232, %vm706
        %v708 = vsel %vm707, %v705, 1e+30
        %v709 = vld [vmem:[#allocation4] sm:$0x1]
        %v710 = vmin.f32 %v709, %v708
        %711 = vst.msk [vmem:[#allocation4] sm:$0x1] %vm273, %v710
        %s712 = scvt.s32.f32 %s663
        %v713 = vstv %s712
        %v714 = vsub.f32 %v636, %v713
        %v715 = vand.u32 2147483647, %v714
        %v717 = vlaneseq
        %v718 = vshrl.u32 %v717, 7
        %v719 = vsub.s32 0, %v718
        %v720 = vrot.slane %v715, %v719
        %v721 = vlaneseq
        %v722 = vshrl.u32 %v721, 7
        %v723 = vsub.s32 1, %v722
        %v724 = vrot.slane %v715, %v723
        %v727 = vsel %vm326, %v720, 0.0
        %v728 = vsel %vm326, %v724, 0.0
        %v729 = vadd.f32 %v727, %v728
        %730 = vadd.xlane.f32.xlu0 %v729
        %v731 = vpop.xlane.xlu0 %730
        %v732 = vld [vmem:[#allocation5] sm:$0x1]
        %v733 = vsel %vm662, %v731, %v732
        %734 = vst.msk [vmem:[#allocation5] sm:$0x1] %vm273, %v733
        %p735 = scmp.eq.s32.totalorder %s24, 1
        // Predicated region
        $region45: #{tpu_custom_call.1} parent=31 // pred_check
          %p736 = pneg %p735
        $region46: #{tpu_custom_call.1} parent=31 // pred_check_branch
          %738 = sbr.rel (%p736) target = $region48
        $region47: #{tpu_custom_call.1} parent=31 // pred_region
          %vm739 = vcmp.lt.s32.totalorder %v211, 0
          %v740 = vld [vmem:[#allocation2] sm:$0x1]
          %v741 = vadd.f32 %v740, 0.3
          %v742 = vld [vmem:[#allocation5] sm:$0x1]
          %v743 = vld [vmem:[#allocation3] sm:$0x1]
          %v744 = vld [vmem:[#allocation4] sm:$0x1]
          %v745 = vsub.f32 %v742, %v743
          %v746 = vsub.f32 %v745, %v744
          %v747 = vadd.f32 %v746, 0.3
          %v748 = vmax.f32 %v747, 0.0
          %v749 = vsel %vm739, %v221, 4294967295
          %v750 = vsel %vm273, %v749, 2147483648
          %v751 = vand.u32 %v750, 65535
          %v752 = vshra.s32 %v750, 16
          %v753 = vcvt.s32.f32 %v751
          %v754 = vcvt.s32.f32 %v752
          %755 = vmax.xlane.f32.xlu0 %v754
          %v756 = vpop.xlane.xlu0 %755
          %vm757 = vcmp.eq.f32.partialorder %v754, %v756
          %v758 = vsel %vm757, %v753, -inf
          %759 = vmax.xlane.f32.xlu0 %v758
          %v760 = vpop.xlane.xlu0 %759
          %v761 = vcvt.f32.s32 %v760
          %v762 = vcvt.f32.s32 %v756
          %v763 = vshll.u32 %v762, 16
          %v764 = vadd.s32 %v763, %v761
          %vm765 = vcmp.eq.s32.totalorder %v221, %v764
          %v766 = vsel %vm765, %v741, 0.0
          %vm767 = vcmp.gt.s32.totalorder %v221, %v764
          %vm768 = vmxor %vm739, 1
          %vm769 = vmand %vm767, %vm768
          %v770 = vsel %vm769, %v748, 0.0
          %v771 = vadd.f32 %v766, %v770
          %v772 = vsel %vm273, %v771, 0.0
          %773 = vadd.xlane.f32.xlu0 %v772
          %v774 = vpop.xlane.xlu0 %773
          %vm775 = vcmask 0
          %776 = vst.msk [vmem:[#allocation13] sm:$0x1] %vm775, %v774
        $region48: #{tpu_custom_call.1} parent=31 // pred_fallthru
          _
        // Predicated region
        $region49: #{tpu_custom_call.1} parent=31 // pred_check
          %p777 = pneg %p105
        $region50: #{tpu_custom_call.1} parent=31 // pred_check_branch
          %779 = sbr.rel (%p777) target = $region52
        $region51: #{tpu_custom_call.1} parent=31 // pred_region
          %s781 = ssub.s32 16, 16
          %782 = vsyncadd [#allocation10], %s781
          %s784 = sshll.u32 [#allocation13], 4
          %s785 = int_to_ptr.vmem [resolvable:$true] %s784
          %787 = dma.vmem_to_hbm [thread:$0]  %s785, 16, %s4, [#allocation10]
        $region52: #{tpu_custom_call.1} parent=31 // pred_fallthru
          _
        // Predicated region
        $region53: #{tpu_custom_call.1} parent=31 // pred_check
          %p788 = pneg %p105
        $region54: #{tpu_custom_call.1} parent=31 // pred_check_branch
          %790 = sbr.rel (%p788) target = $region56
        $region55: #{tpu_custom_call.1} parent=31 // pred_region
          %791 = dma.done [#allocation10], 16
        $region56: #{tpu_custom_call.1} parent=31 // pred_fallthru
          _
      $region32: #{tpu_custom_call.1} parent=5 // pred_fallthru
        _
      %p792 = scmp.le.s32.totalorder 2, %s19
      // Predicated region
      $region57: #{tpu_custom_call.1} parent=5 // pred_check
        %p793 = pneg %p792
      $region58: #{tpu_custom_call.1} parent=5 // pred_check_branch
        %795 = sbr.rel (%p793) target = $region60
      $region59: #{tpu_custom_call.1} parent=5 // pred_region
        %s796 = ssub.s32 %s19, 2
      $region60: #{tpu_custom_call.1} parent=5 // pred_fallthru
        _
    $region6: #{tpu_custom_call.1} parent=1 // loop_footer
      %s23 = sadd.s32 1, %s19
    $region7: #{tpu_custom_call.1} parent=1 // loop_footer_branch
      %18 = sbr.rel target = $region3
    $region8: #{tpu_custom_call.1} parent=1 // loop_exit
      _
    %797 = vsyncpa [#allocation9], 1
    %s798 = scalar_lea.sflag [#allocation9], 1
    %799 = vsyncpa %s798, 1
    %800 = vsyncpa [#allocation12], 1
    %801 = vsyncpa [#allocation10], 1
    %s802 = scalar_lea.sflag [#allocation10], 1
    %803 = vsyncpa %s802, 1

</llo_original>
